<compile_context>
chip_gen: v6e
topology: v6e:2x2x1
jax: 0.10.0
libtpu: 0.0.40
codegen_flags: <defaults>
</compile_context>

<pallas_src>
import functools

import jax
import jax.numpy as jnp
from jax.experimental import pallas as pl
from jax.experimental.pallas import tpu as pltpu

EPS = 1e-5


def _bottleneck_kernel(x_ref, s1_ref, b1_ref, w1_ref, b2_ref, w2_ref, mask_ref,
                       out_ref, *, W, mxu_dtype):
    # x_ref   : (NB, Cin, H*W)        NB batch elements, channel-major (lane = H*W)
    # s1/b1   : (Cin, 1)              folded BN1 scale / bias (f32)
    # w1_ref  : (Cinter, Cin)         1x1 conv weights with BN2 scale pre-folded (mxu_dtype)
    # b2_ref  : (Cinter, 1)           folded BN2 bias (f32)
    # w2_ref  : (9, Cout, Cinter)     3x3 conv weights, one (Cout, Cinter) slice per tap
    # mask_ref: (9, H*W)              precomputed {0,1} boundary masks per tap (mxu_dtype)
    # out_ref : (NB, Cin+Cout, H*W)   fused [x ; conv_out] output (NCHW flattened)
    NB, Cin, HW = x_ref.shape
    Cout = w2_ref.shape[1]

    s1 = s1_ref[...]                                            # (Cin, 1) f32
    b1 = b1_ref[...]
    b2 = b2_ref[...]                                            # (Cinter, 1) f32
    w1 = w1_ref[...]                                            # (Cinter, Cin) mxu_dtype

    # Unrolled per-image loop: amortizes grid-step overhead over NB images.
    for n in range(NB):
        xn = x_ref[n].astype(jnp.float32)                       # (Cin, HW)

        # BN1 + ReLU (per-channel affine, broadcast over the spatial lane axis).
        hn = jnp.maximum(xn * s1 + b1, 0.0)                     # (Cin, HW) f32

        # 1x1 conv (BN2 scale folded into weights) + BN2 bias + ReLU.
        t = jnp.dot(w1, hn.astype(mxu_dtype),
                    preferred_element_type=jnp.float32)         # (Cinter, HW) f32
        t = jnp.maximum(t + b2, 0.0).astype(mxu_dtype)          # matmul operand dtype

        # 3x3 conv, padding=1: 9 accumulated per-tap matmuls.  Each tap is a
        # lane rotation (XLU) of t plus one multiply by a precomputed boundary
        # mask -- no im2col slab, no per-step integer index math.
        acc = jnp.zeros((Cout, HW), jnp.float32)
        for dy in range(3):
            for dx in range(3):
                tap = dy * 3 + dx
                shift = ((1 - dy) * W + (1 - dx)) % HW
                rolled = pltpu.roll(t, shift=shift, axis=1) if shift else t
                if not (dy == 1 and dx == 1):                   # centre tap needs no mask
                    rolled = rolled * mask_ref[tap].reshape(1, HW)
                acc = acc + jnp.dot(w2_ref[tap], rolled,
                                    preferred_element_type=jnp.float32)

        # Fused channel concat: write [x ; conv] lane-dense in one shot.
        out_ref[n] = jnp.concatenate([xn, acc], axis=0).astype(out_ref.dtype)


def _pick_batch_block(N, Cin, HW, max_block_bytes=1 << 20):
    """Largest divisor of N that keeps the x block small-ish and (for v7x's two
    TensorCores) leaves at least 2 grid steps when N >= 2."""
    best = 1
    for nb in range(1, N + 1):
        if N % nb:
            continue
        if nb * Cin * HW * 4 > max_block_bytes:
            continue
        if N >= 2 and (N // nb) < 2:
            continue
        best = nb
    return best


def bottleneck_block(x_nchw, params, *, mxu_dtype=jnp.bfloat16, batch_block=None):
    """Pallas implementation of BottleneckBlock.forward (eval mode, droprate == 0)."""
    (g1, be1, m1, v1, w1_oihw, g2, be2, m2, v2, w2_oihw) = params

    N, Cin, H, W = x_nchw.shape
    Cinter = w1_oihw.shape[0]
    Cout = w2_oihw.shape[0]
    HW = H * W

    # Fold BN (eval mode) into scale / bias.
    s1 = g1 / jnp.sqrt(v1 + EPS)
    b1 = be1 - m1 * s1
    s2 = g2 / jnp.sqrt(v2 + EPS)
    b2 = be2 - m2 * s2

    # Fold BN2 scale into the 1x1 conv: relu(s2*(W1@h)+b2) == relu((s2*W1)@h + b2).
    w1s = (w1_oihw[:, :, 0, 0] * s2[:, None]).astype(mxu_dtype)          # (Cinter, Cin)
    # 3x3 conv weights as 9 per-tap (Cout, Cinter) slices, tap = dy*3 + dx.
    w2_taps = jnp.transpose(w2_oihw, (2, 3, 0, 1)).reshape(9, Cout, Cinter).astype(mxu_dtype)

    # Precomputed boundary masks (one {0,1} row of length HW per tap): removes
    # all in-kernel div/mod/cmp/select mask arithmetic.
    pos = jnp.arange(HW, dtype=jnp.int32)
    hh = pos // W
    ww = pos % W
    masks = []
    for dy in range(3):
        for dx in range(3):
            m = jnp.ones((HW,), jnp.float32)
            if dy == 0:
                m = m * (hh >= 1)
            elif dy == 2:
                m = m * (hh < H - 1)
            if dx == 0:
                m = m * (ww >= 1)
            elif dx == 2:
                m = m * (ww < W - 1)
            masks.append(m)
    mask_arr = jnp.stack(masks, axis=0).astype(mxu_dtype)                # (9, HW)

    # Channel-major, spatially flattened input: plain reshape, no transpose.
    x_flat = x_nchw.reshape(N, Cin, HW).astype(jnp.float32)

    if batch_block is None:
        batch_block = _pick_batch_block(N, Cin, HW)
    NB = batch_block
    assert N % NB == 0, (N, NB)

    kernel = functools.partial(_bottleneck_kernel, W=W, mxu_dtype=mxu_dtype)

    out_flat = pl.pallas_call(
        kernel,
        out_shape=jax.ShapeDtypeStruct((N, Cin + Cout, HW), jnp.float32),
        grid=(N // NB,),
        in_specs=[
            pl.BlockSpec((NB, Cin, HW), lambda n: (n, 0, 0)),
            pl.BlockSpec((Cin, 1), lambda n: (0, 0)),
            pl.BlockSpec((Cin, 1), lambda n: (0, 0)),
            pl.BlockSpec((Cinter, Cin), lambda n: (0, 0)),
            pl.BlockSpec((Cinter, 1), lambda n: (0, 0)),
            pl.BlockSpec((9, Cout, Cinter), lambda n: (0, 0, 0)),
            pl.BlockSpec((9, HW), lambda n: (0, 0)),
        ],
        out_specs=pl.BlockSpec((NB, Cin + Cout, HW), lambda n: (n, 0, 0)),
        compiler_params=pltpu.CompilerParams(
            dimension_semantics=("parallel",)),
    )(x_flat,
      s1.reshape(Cin, 1), b1.reshape(Cin, 1),
      w1s, b2.reshape(Cinter, 1), w2_taps, mask_arr)

    # Concat already fused in the kernel; only a free reshape remains.
    return out_flat.reshape(N, Cin + Cout, H, W)


def reference_block(x, params):
    """Pure-JAX reference mirroring the PyTorch module (eval mode, droprate=0)."""
    (g1, be1, m1, v1, w1, g2, be2, m2, v2, w2) = params

    def bn(x, g, b, m, v):
        sh = (1, -1, 1, 1)
        return (x - m.reshape(sh)) / jnp.sqrt(v.reshape(sh) + EPS) * g.reshape(sh) + b.reshape(sh)

    h = jnp.maximum(bn(x, g1, be1, m1, v1), 0.0)
    out = jax.lax.conv_general_dilated(
        h, w1, (1, 1), 'VALID', dimension_numbers=('NCHW', 'OIHW', 'NCHW'))
    h2 = jnp.maximum(bn(out, g2, be2, m2, v2), 0.0)
    out2 = jax.lax.conv_general_dilated(
        h2, w2, (1, 1), ((1, 1), (1, 1)),
        dimension_numbers=('NCHW', 'OIHW', 'NCHW'))
    return jnp.concatenate([x, out2], axis=1)


def make_params(key, in_planes, out_planes):
    inter_planes = out_planes * 4
    ks = jax.random.split(key, 10)
    g1 = jax.random.uniform(ks[0], (in_planes,), jnp.float32, 0.5, 1.5)
    be1 = 0.1 * jax.random.normal(ks[1], (in_planes,), jnp.float32)
    m1 = 0.1 * jax.random.normal(ks[2], (in_planes,), jnp.float32)
    v1 = jax.random.uniform(ks[3], (in_planes,), jnp.float32, 0.5, 1.5)
    w1 = 0.1 * jax.random.normal(ks[4], (inter_planes, in_planes, 1, 1), jnp.float32)
    g2 = jax.random.uniform(ks[5], (inter_planes,), jnp.float32, 0.5, 1.5)
    be2 = 0.1 * jax.random.normal(ks[6], (inter_planes,), jnp.float32)
    m2 = 0.1 * jax.random.normal(ks[7], (inter_planes,), jnp.float32)
    v2 = jax.random.uniform(ks[8], (inter_planes,), jnp.float32, 0.5, 1.5)
    w2 = 0.1 * jax.random.normal(ks[9], (out_planes, inter_planes, 3, 3), jnp.float32)
    return (g1, be1, m1, v1, w1, g2, be2, m2, v2, w2)


if __name__ == "__main__":
    key = jax.random.PRNGKey(0)
    k_x, k_p = jax.random.split(key)

    # N=4 exercises the batched-block path (NB=2 -> 2 "parallel" grid steps).
    N, in_planes, out_planes, H, W = 4, 4, 4, 16, 16
    x = jax.random.normal(k_x, (N, in_planes, H, W), jnp.float32)
    params = make_params(k_p, in_planes, out_planes)

    ref = jax.block_until_ready(reference_block(x, params))

    # Exact path (f32 MXU operands) -- tight tolerance.
    out_f32 = jax.block_until_ready(
        bottleneck_block(x, params, mxu_dtype=jnp.float32))
    assert out_f32.shape == (N, in_planes + out_planes, H, W), out_f32.shape
    assert jnp.allclose(out_f32, ref, atol=1e-4, rtol=1e-4), \
        float(jnp.max(jnp.abs(out_f32 - ref)))

    # Default path (bf16 MXU operands, f32 accumulate) -- bf16-appropriate tolerance.
    out_bf16 = jax.block_until_ready(bottleneck_block(x, params))
    assert out_bf16.shape == (N, in_planes + out_planes, H, W), out_bf16.shape
    assert jnp.allclose(out_bf16, ref, atol=5e-2, rtol=5e-2), \
        float(jnp.max(jnp.abs(out_bf16 - ref)))

    print("KERNEL_OK")
</pallas_src>

<mosaic_0001>
module attributes {stable_mosaic.version = 11 : i64} {
  func.func @_bottleneck_kernel(%arg0: i32, %arg1: memref<2x4x256xf32, #tpu.memory_space<vmem>>, %arg2: memref<4x1xf32, #tpu.memory_space<vmem>>, %arg3: memref<4x1xf32, #tpu.memory_space<vmem>>, %arg4: memref<16x4xf32, #tpu.memory_space<vmem>>, %arg5: memref<16x1xf32, #tpu.memory_space<vmem>>, %arg6: memref<9x4x16xf32, #tpu.memory_space<vmem>>, %arg7: memref<9x256xf32, #tpu.memory_space<vmem>>, %arg8: memref<2x8x256xf32, #tpu.memory_space<vmem>>) attributes {dimension_semantics = [#tpu.dimension_semantics<parallel>], iteration_bounds = array<i64: 2>, scalar_prefetch = 0 : i64, scratch_operands = 0 : i64, tpu.core_type = #tpu.core_type<tc>, window_params = [{transform_indices = @transform_0, window_bounds = array<i64: 2, 4, 256>}, {pipeline_mode = #tpu.pipeline_mode<synchronous>, transform_indices = @transform_1, window_bounds = array<i64: 4, 1>}, {pipeline_mode = #tpu.pipeline_mode<synchronous>, transform_indices = @transform_2, window_bounds = array<i64: 4, 1>}, {pipeline_mode = #tpu.pipeline_mode<synchronous>, transform_indices = @transform_3, window_bounds = array<i64: 16, 4>}, {pipeline_mode = #tpu.pipeline_mode<synchronous>, transform_indices = @transform_4, window_bounds = array<i64: 16, 1>}, {pipeline_mode = #tpu.pipeline_mode<synchronous>, transform_indices = @transform_5, window_bounds = array<i64: 9, 4, 16>}, {pipeline_mode = #tpu.pipeline_mode<synchronous>, transform_indices = @transform_6, window_bounds = array<i64: 9, 256>}, {transform_indices = @transform_7, window_bounds = array<i64: 2, 8, 256>}]} {
    %c0 = arith.constant 0 : index
    %c0_0 = arith.constant 0 : index
    %0 = vector.load %arg2[%c0, %c0_0] : memref<4x1xf32, #tpu.memory_space<vmem>>, vector<4x1xf32>
    %c0_1 = arith.constant 0 : index
    %c0_2 = arith.constant 0 : index
    %1 = vector.load %arg3[%c0_1, %c0_2] : memref<4x1xf32, #tpu.memory_space<vmem>>, vector<4x1xf32>
    %c0_3 = arith.constant 0 : index
    %c0_4 = arith.constant 0 : index
    %2 = vector.load %arg5[%c0_3, %c0_4] : memref<16x1xf32, #tpu.memory_space<vmem>>, vector<16x1xf32>
    %c0_5 = arith.constant 0 : index
    %c0_6 = arith.constant 0 : index
    %3 = vector.load %arg4[%c0_5, %c0_6] : memref<16x4xf32, #tpu.memory_space<vmem>>, vector<16x4xf32>
    %c0_7 = arith.constant 0 : index
    %c0_8 = arith.constant 0 : index
    %c0_9 = arith.constant 0 : index
    %4 = vector.load %arg1[%c0_7, %c0_8, %c0_9] : memref<2x4x256xf32, #tpu.memory_space<vmem>>, vector<1x4x256xf32>
    %5 = vector.shape_cast %4 : vector<1x4x256xf32> to vector<4x256xf32>
    %6 = vector.broadcast %0 : vector<4x1xf32> to vector<4x256xf32>
    %7 = arith.mulf %5, %6 : vector<4x256xf32>
    %8 = vector.broadcast %1 : vector<4x1xf32> to vector<4x256xf32>
    %9 = arith.addf %7, %8 : vector<4x256xf32>
    %cst = arith.constant 0.000000e+00 : f32
    %10 = vector.broadcast %cst : f32 to vector<4x256xf32>
    %11 = arith.maximumf %9, %10 : vector<4x256xf32>
    %cst_10 = arith.constant dense<0.000000e+00> : vector<16x256xf32>
    %12 = tpu.matmul %3, %11, %cst_10 {dimension_numbers = #tpu.dot_dimension_numbers<[1], [0], [0], [1], [0, 0, 1, 1], [], []>} : vector<16x4xf32>, vector<4x256xf32>, vector<16x256xf32> -> vector<16x256xf32>
    %13 = vector.broadcast %2 : vector<16x1xf32> to vector<16x256xf32>
    %14 = arith.addf %12, %13 : vector<16x256xf32>
    %cst_11 = arith.constant 0.000000e+00 : f32
    %15 = vector.broadcast %cst_11 : f32 to vector<16x256xf32>
    %16 = arith.maximumf %14, %15 : vector<16x256xf32>
    %cst_12 = arith.constant 0.000000e+00 : f32
    %17 = vector.broadcast %cst_12 : f32 to vector<4x256xf32>
    %c17_i32 = arith.constant 17 : i32
    %18 = tpu.dynamic_rotate %16 by %c17_i32 dim 1 : vector<16x256xf32>, i32 -> vector<16x256xf32>
    %c0_13 = arith.constant 0 : index
    %c0_14 = arith.constant 0 : index
    %19 = vector.load %arg7[%c0_13, %c0_14] : memref<9x256xf32, #tpu.memory_space<vmem>>, vector<1x256xf32>
    %20 = vector.shape_cast %19 : vector<1x256xf32> to vector<256xf32>
    %21 = vector.shape_cast %20 : vector<256xf32> to vector<1x256xf32>
    %22 = vector.broadcast %21 : vector<1x256xf32> to vector<16x256xf32>
    %23 = arith.mulf %18, %22 : vector<16x256xf32>
    %c0_15 = arith.constant 0 : index
    %c0_16 = arith.constant 0 : index
    %c0_17 = arith.constant 0 : index
    %24 = vector.load %arg6[%c0_15, %c0_16, %c0_17] : memref<9x4x16xf32, #tpu.memory_space<vmem>>, vector<1x4x16xf32>
    %25 = vector.shape_cast %24 : vector<1x4x16xf32> to vector<4x16xf32>
    %cst_18 = arith.constant dense<0.000000e+00> : vector<4x256xf32>
    %26 = tpu.matmul %25, %23, %cst_18 {dimension_numbers = #tpu.dot_dimension_numbers<[1], [0], [0], [1], [0, 0, 1, 1], [], []>} : vector<4x16xf32>, vector<16x256xf32>, vector<4x256xf32> -> vector<4x256xf32>
    %27 = arith.addf %17, %26 : vector<4x256xf32>
    %c16_i32 = arith.constant 16 : i32
    %28 = tpu.dynamic_rotate %16 by %c16_i32 dim 1 : vector<16x256xf32>, i32 -> vector<16x256xf32>
    %c1 = arith.constant 1 : index
    %c0_19 = arith.constant 0 : index
    %29 = vector.load %arg7[%c1, %c0_19] : memref<9x256xf32, #tpu.memory_space<vmem>>, vector<1x256xf32>
    %30 = vector.shape_cast %29 : vector<1x256xf32> to vector<256xf32>
    %31 = vector.shape_cast %30 : vector<256xf32> to vector<1x256xf32>
    %32 = vector.broadcast %31 : vector<1x256xf32> to vector<16x256xf32>
    %33 = arith.mulf %28, %32 : vector<16x256xf32>
    %c1_20 = arith.constant 1 : index
    %c0_21 = arith.constant 0 : index
    %c0_22 = arith.constant 0 : index
    %34 = vector.load %arg6[%c1_20, %c0_21, %c0_22] : memref<9x4x16xf32, #tpu.memory_space<vmem>>, vector<1x4x16xf32>
    %35 = vector.shape_cast %34 : vector<1x4x16xf32> to vector<4x16xf32>
    %cst_23 = arith.constant dense<0.000000e+00> : vector<4x256xf32>
    %36 = tpu.matmul %35, %33, %cst_23 {dimension_numbers = #tpu.dot_dimension_numbers<[1], [0], [0], [1], [0, 0, 1, 1], [], []>} : vector<4x16xf32>, vector<16x256xf32>, vector<4x256xf32> -> vector<4x256xf32>
    %37 = arith.addf %27, %36 : vector<4x256xf32>
    %c15_i32 = arith.constant 15 : i32
    %38 = tpu.dynamic_rotate %16 by %c15_i32 dim 1 : vector<16x256xf32>, i32 -> vector<16x256xf32>
    %c2 = arith.constant 2 : index
    %c0_24 = arith.constant 0 : index
    %39 = vector.load %arg7[%c2, %c0_24] : memref<9x256xf32, #tpu.memory_space<vmem>>, vector<1x256xf32>
    %40 = vector.shape_cast %39 : vector<1x256xf32> to vector<256xf32>
    %41 = vector.shape_cast %40 : vector<256xf32> to vector<1x256xf32>
    %42 = vector.broadcast %41 : vector<1x256xf32> to vector<16x256xf32>
    %43 = arith.mulf %38, %42 : vector<16x256xf32>
    %c2_25 = arith.constant 2 : index
    %c0_26 = arith.constant 0 : index
    %c0_27 = arith.constant 0 : index
    %44 = vector.load %arg6[%c2_25, %c0_26, %c0_27] : memref<9x4x16xf32, #tpu.memory_space<vmem>>, vector<1x4x16xf32>
    %45 = vector.shape_cast %44 : vector<1x4x16xf32> to vector<4x16xf32>
    %cst_28 = arith.constant dense<0.000000e+00> : vector<4x256xf32>
    %46 = tpu.matmul %45, %43, %cst_28 {dimension_numbers = #tpu.dot_dimension_numbers<[1], [0], [0], [1], [0, 0, 1, 1], [], []>} : vector<4x16xf32>, vector<16x256xf32>, vector<4x256xf32> -> vector<4x256xf32>
    %47 = arith.addf %37, %46 : vector<4x256xf32>
    %c1_i32 = arith.constant 1 : i32
    %48 = tpu.dynamic_rotate %16 by %c1_i32 dim 1 : vector<16x256xf32>, i32 -> vector<16x256xf32>
    %c3 = arith.constant 3 : index
    %c0_29 = arith.constant 0 : index
    %49 = vector.load %arg7[%c3, %c0_29] : memref<9x256xf32, #tpu.memory_space<vmem>>, vector<1x256xf32>
    %50 = vector.shape_cast %49 : vector<1x256xf32> to vector<256xf32>
    %51 = vector.shape_cast %50 : vector<256xf32> to vector<1x256xf32>
    %52 = vector.broadcast %51 : vector<1x256xf32> to vector<16x256xf32>
    %53 = arith.mulf %48, %52 : vector<16x256xf32>
    %c3_30 = arith.constant 3 : index
    %c0_31 = arith.constant 0 : index
    %c0_32 = arith.constant 0 : index
    %54 = vector.load %arg6[%c3_30, %c0_31, %c0_32] : memref<9x4x16xf32, #tpu.memory_space<vmem>>, vector<1x4x16xf32>
    %55 = vector.shape_cast %54 : vector<1x4x16xf32> to vector<4x16xf32>
    %cst_33 = arith.constant dense<0.000000e+00> : vector<4x256xf32>
    %56 = tpu.matmul %55, %53, %cst_33 {dimension_numbers = #tpu.dot_dimension_numbers<[1], [0], [0], [1], [0, 0, 1, 1], [], []>} : vector<4x16xf32>, vector<16x256xf32>, vector<4x256xf32> -> vector<4x256xf32>
    %57 = arith.addf %47, %56 : vector<4x256xf32>
    %c4 = arith.constant 4 : index
    %c0_34 = arith.constant 0 : index
    %c0_35 = arith.constant 0 : index
    %58 = vector.load %arg6[%c4, %c0_34, %c0_35] : memref<9x4x16xf32, #tpu.memory_space<vmem>>, vector<1x4x16xf32>
    %59 = vector.shape_cast %58 : vector<1x4x16xf32> to vector<4x16xf32>
    %cst_36 = arith.constant dense<0.000000e+00> : vector<4x256xf32>
    %60 = tpu.matmul %59, %16, %cst_36 {dimension_numbers = #tpu.dot_dimension_numbers<[1], [0], [0], [1], [0, 0, 1, 1], [], []>} : vector<4x16xf32>, vector<16x256xf32>, vector<4x256xf32> -> vector<4x256xf32>
    %61 = arith.addf %57, %60 : vector<4x256xf32>
    %c255_i32 = arith.constant 255 : i32
    %62 = tpu.dynamic_rotate %16 by %c255_i32 dim 1 : vector<16x256xf32>, i32 -> vector<16x256xf32>
    %c5 = arith.constant 5 : index
    %c0_37 = arith.constant 0 : index
    %63 = vector.load %arg7[%c5, %c0_37] : memref<9x256xf32, #tpu.memory_space<vmem>>, vector<1x256xf32>
    %64 = vector.shape_cast %63 : vector<1x256xf32> to vector<256xf32>
    %65 = vector.shape_cast %64 : vector<256xf32> to vector<1x256xf32>
    %66 = vector.broadcast %65 : vector<1x256xf32> to vector<16x256xf32>
    %67 = arith.mulf %62, %66 : vector<16x256xf32>
    %c5_38 = arith.constant 5 : index
    %c0_39 = arith.constant 0 : index
    %c0_40 = arith.constant 0 : index
    %68 = vector.load %arg6[%c5_38, %c0_39, %c0_40] : memref<9x4x16xf32, #tpu.memory_space<vmem>>, vector<1x4x16xf32>
    %69 = vector.shape_cast %68 : vector<1x4x16xf32> to vector<4x16xf32>
    %cst_41 = arith.constant dense<0.000000e+00> : vector<4x256xf32>
    %70 = tpu.matmul %69, %67, %cst_41 {dimension_numbers = #tpu.dot_dimension_numbers<[1], [0], [0], [1], [0, 0, 1, 1], [], []>} : vector<4x16xf32>, vector<16x256xf32>, vector<4x256xf32> -> vector<4x256xf32>
    %71 = arith.addf %61, %70 : vector<4x256xf32>
    %c241_i32 = arith.constant 241 : i32
    %72 = tpu.dynamic_rotate %16 by %c241_i32 dim 1 : vector<16x256xf32>, i32 -> vector<16x256xf32>
    %c6 = arith.constant 6 : index
    %c0_42 = arith.constant 0 : index
    %73 = vector.load %arg7[%c6, %c0_42] : memref<9x256xf32, #tpu.memory_space<vmem>>, vector<1x256xf32>
    %74 = vector.shape_cast %73 : vector<1x256xf32> to vector<256xf32>
    %75 = vector.shape_cast %74 : vector<256xf32> to vector<1x256xf32>
    %76 = vector.broadcast %75 : vector<1x256xf32> to vector<16x256xf32>
    %77 = arith.mulf %72, %76 : vector<16x256xf32>
    %c6_43 = arith.constant 6 : index
    %c0_44 = arith.constant 0 : index
    %c0_45 = arith.constant 0 : index
    %78 = vector.load %arg6[%c6_43, %c0_44, %c0_45] : memref<9x4x16xf32, #tpu.memory_space<vmem>>, vector<1x4x16xf32>
    %79 = vector.shape_cast %78 : vector<1x4x16xf32> to vector<4x16xf32>
    %cst_46 = arith.constant dense<0.000000e+00> : vector<4x256xf32>
    %80 = tpu.matmul %79, %77, %cst_46 {dimension_numbers = #tpu.dot_dimension_numbers<[1], [0], [0], [1], [0, 0, 1, 1], [], []>} : vector<4x16xf32>, vector<16x256xf32>, vector<4x256xf32> -> vector<4x256xf32>
    %81 = arith.addf %71, %80 : vector<4x256xf32>
    %c240_i32 = arith.constant 240 : i32
    %82 = tpu.dynamic_rotate %16 by %c240_i32 dim 1 : vector<16x256xf32>, i32 -> vector<16x256xf32>
    %c7 = arith.constant 7 : index
    %c0_47 = arith.constant 0 : index
    %83 = vector.load %arg7[%c7, %c0_47] : memref<9x256xf32, #tpu.memory_space<vmem>>, vector<1x256xf32>
    %84 = vector.shape_cast %83 : vector<1x256xf32> to vector<256xf32>
    %85 = vector.shape_cast %84 : vector<256xf32> to vector<1x256xf32>
    %86 = vector.broadcast %85 : vector<1x256xf32> to vector<16x256xf32>
    %87 = arith.mulf %82, %86 : vector<16x256xf32>
    %c7_48 = arith.constant 7 : index
    %c0_49 = arith.constant 0 : index
    %c0_50 = arith.constant 0 : index
    %88 = vector.load %arg6[%c7_48, %c0_49, %c0_50] : memref<9x4x16xf32, #tpu.memory_space<vmem>>, vector<1x4x16xf32>
    %89 = vector.shape_cast %88 : vector<1x4x16xf32> to vector<4x16xf32>
    %cst_51 = arith.constant dense<0.000000e+00> : vector<4x256xf32>
    %90 = tpu.matmul %89, %87, %cst_51 {dimension_numbers = #tpu.dot_dimension_numbers<[1], [0], [0], [1], [0, 0, 1, 1], [], []>} : vector<4x16xf32>, vector<16x256xf32>, vector<4x256xf32> -> vector<4x256xf32>
    %91 = arith.addf %81, %90 : vector<4x256xf32>
    %c239_i32 = arith.constant 239 : i32
    %92 = tpu.dynamic_rotate %16 by %c239_i32 dim 1 : vector<16x256xf32>, i32 -> vector<16x256xf32>
    %c8 = arith.constant 8 : index
    %c0_52 = arith.constant 0 : index
    %93 = vector.load %arg7[%c8, %c0_52] : memref<9x256xf32, #tpu.memory_space<vmem>>, vector<1x256xf32>
    %94 = vector.shape_cast %93 : vector<1x256xf32> to vector<256xf32>
    %95 = vector.shape_cast %94 : vector<256xf32> to vector<1x256xf32>
    %96 = vector.broadcast %95 : vector<1x256xf32> to vector<16x256xf32>
    %97 = arith.mulf %92, %96 : vector<16x256xf32>
    %c8_53 = arith.constant 8 : index
    %c0_54 = arith.constant 0 : index
    %c0_55 = arith.constant 0 : index
    %98 = vector.load %arg6[%c8_53, %c0_54, %c0_55] : memref<9x4x16xf32, #tpu.memory_space<vmem>>, vector<1x4x16xf32>
    %99 = vector.shape_cast %98 : vector<1x4x16xf32> to vector<4x16xf32>
    %cst_56 = arith.constant dense<0.000000e+00> : vector<4x256xf32>
    %100 = tpu.matmul %99, %97, %cst_56 {dimension_numbers = #tpu.dot_dimension_numbers<[1], [0], [0], [1], [0, 0, 1, 1], [], []>} : vector<4x16xf32>, vector<16x256xf32>, vector<4x256xf32> -> vector<4x256xf32>
    %101 = arith.addf %91, %100 : vector<4x256xf32>
    %102 = tpu.concatenate %5, %101 in 0 : vector<4x256xf32>, vector<4x256xf32> -> vector<8x256xf32>
    %c0_57 = arith.constant 0 : index
    %c0_58 = arith.constant 0 : index
    %c0_59 = arith.constant 0 : index
    %103 = vector.load %arg8[%c0_57, %c0_58, %c0_59] : memref<2x8x256xf32, #tpu.memory_space<vmem>>, vector<1x8x256xf32>
    %104 = vector.shape_cast %103 : vector<1x8x256xf32> to vector<8x256xf32>
    %105 = vector.shape_cast %102 : vector<8x256xf32> to vector<1x8x256xf32>
    tpu.vector_store %arg8[%c0_57, %c0_58, %c0_59], %105 {strides = array<i32>} : memref<2x8x256xf32, #tpu.memory_space<vmem>>, vector<1x8x256xf32>,
    %c1_60 = arith.constant 1 : index
    %c0_61 = arith.constant 0 : index
    %c0_62 = arith.constant 0 : index
    %106 = vector.load %arg1[%c1_60, %c0_61, %c0_62] : memref<2x4x256xf32, #tpu.memory_space<vmem>>, vector<1x4x256xf32>
    %107 = vector.shape_cast %106 : vector<1x4x256xf32> to vector<4x256xf32>
    %108 = vector.broadcast %0 : vector<4x1xf32> to vector<4x256xf32>
    %109 = arith.mulf %107, %108 : vector<4x256xf32>
    %110 = vector.broadcast %1 : vector<4x1xf32> to vector<4x256xf32>
    %111 = arith.addf %109, %110 : vector<4x256xf32>
    %cst_63 = arith.constant 0.000000e+00 : f32
    %112 = vector.broadcast %cst_63 : f32 to vector<4x256xf32>
    %113 = arith.maximumf %111, %112 : vector<4x256xf32>
    %cst_64 = arith.constant dense<0.000000e+00> : vector<16x256xf32>
    %114 = tpu.matmul %3, %113, %cst_64 {dimension_numbers = #tpu.dot_dimension_numbers<[1], [0], [0], [1], [0, 0, 1, 1], [], []>} : vector<16x4xf32>, vector<4x256xf32>, vector<16x256xf32> -> vector<16x256xf32>
    %115 = vector.broadcast %2 : vector<16x1xf32> to vector<16x256xf32>
    %116 = arith.addf %114, %115 : vector<16x256xf32>
    %cst_65 = arith.constant 0.000000e+00 : f32
    %117 = vector.broadcast %cst_65 : f32 to vector<16x256xf32>
    %118 = arith.maximumf %116, %117 : vector<16x256xf32>
    %cst_66 = arith.constant 0.000000e+00 : f32
    %119 = vector.broadcast %cst_66 : f32 to vector<4x256xf32>
    %c17_i32_67 = arith.constant 17 : i32
    %120 = tpu.dynamic_rotate %118 by %c17_i32_67 dim 1 : vector<16x256xf32>, i32 -> vector<16x256xf32>
    %c0_68 = arith.constant 0 : index
    %c0_69 = arith.constant 0 : index
    %121 = vector.load %arg7[%c0_68, %c0_69] : memref<9x256xf32, #tpu.memory_space<vmem>>, vector<1x256xf32>
    %122 = vector.shape_cast %121 : vector<1x256xf32> to vector<256xf32>
    %123 = vector.shape_cast %122 : vector<256xf32> to vector<1x256xf32>
    %124 = vector.broadcast %123 : vector<1x256xf32> to vector<16x256xf32>
    %125 = arith.mulf %120, %124 : vector<16x256xf32>
    %c0_70 = arith.constant 0 : index
    %c0_71 = arith.constant 0 : index
    %c0_72 = arith.constant 0 : index
    %126 = vector.load %arg6[%c0_70, %c0_71, %c0_72] : memref<9x4x16xf32, #tpu.memory_space<vmem>>, vector<1x4x16xf32>
    %127 = vector.shape_cast %126 : vector<1x4x16xf32> to vector<4x16xf32>
    %cst_73 = arith.constant dense<0.000000e+00> : vector<4x256xf32>
    %128 = tpu.matmul %127, %125, %cst_73 {dimension_numbers = #tpu.dot_dimension_numbers<[1], [0], [0], [1], [0, 0, 1, 1], [], []>} : vector<4x16xf32>, vector<16x256xf32>, vector<4x256xf32> -> vector<4x256xf32>
    %129 = arith.addf %119, %128 : vector<4x256xf32>
    %c16_i32_74 = arith.constant 16 : i32
    %130 = tpu.dynamic_rotate %118 by %c16_i32_74 dim 1 : vector<16x256xf32>, i32 -> vector<16x256xf32>
    %c1_75 = arith.constant 1 : index
    %c0_76 = arith.constant 0 : index
    %131 = vector.load %arg7[%c1_75, %c0_76] : memref<9x256xf32, #tpu.memory_space<vmem>>, vector<1x256xf32>
    %132 = vector.shape_cast %131 : vector<1x256xf32> to vector<256xf32>
    %133 = vector.shape_cast %132 : vector<256xf32> to vector<1x256xf32>
    %134 = vector.broadcast %133 : vector<1x256xf32> to vector<16x256xf32>
    %135 = arith.mulf %130, %134 : vector<16x256xf32>
    %c1_77 = arith.constant 1 : index
    %c0_78 = arith.constant 0 : index
    %c0_79 = arith.constant 0 : index
    %136 = vector.load %arg6[%c1_77, %c0_78, %c0_79] : memref<9x4x16xf32, #tpu.memory_space<vmem>>, vector<1x4x16xf32>
    %137 = vector.shape_cast %136 : vector<1x4x16xf32> to vector<4x16xf32>
    %cst_80 = arith.constant dense<0.000000e+00> : vector<4x256xf32>
    %138 = tpu.matmul %137, %135, %cst_80 {dimension_numbers = #tpu.dot_dimension_numbers<[1], [0], [0], [1], [0, 0, 1, 1], [], []>} : vector<4x16xf32>, vector<16x256xf32>, vector<4x256xf32> -> vector<4x256xf32>
    %139 = arith.addf %129, %138 : vector<4x256xf32>
    %c15_i32_81 = arith.constant 15 : i32
    %140 = tpu.dynamic_rotate %118 by %c15_i32_81 dim 1 : vector<16x256xf32>, i32 -> vector<16x256xf32>
    %c2_82 = arith.constant 2 : index
    %c0_83 = arith.constant 0 : index
    %141 = vector.load %arg7[%c2_82, %c0_83] : memref<9x256xf32, #tpu.memory_space<vmem>>, vector<1x256xf32>
    %142 = vector.shape_cast %141 : vector<1x256xf32> to vector<256xf32>
    %143 = vector.shape_cast %142 : vector<256xf32> to vector<1x256xf32>
    %144 = vector.broadcast %143 : vector<1x256xf32> to vector<16x256xf32>
    %145 = arith.mulf %140, %144 : vector<16x256xf32>
    %c2_84 = arith.constant 2 : index
    %c0_85 = arith.constant 0 : index
    %c0_86 = arith.constant 0 : index
    %146 = vector.load %arg6[%c2_84, %c0_85, %c0_86] : memref<9x4x16xf32, #tpu.memory_space<vmem>>, vector<1x4x16xf32>
    %147 = vector.shape_cast %146 : vector<1x4x16xf32> to vector<4x16xf32>
    %cst_87 = arith.constant dense<0.000000e+00> : vector<4x256xf32>
    %148 = tpu.matmul %147, %145, %cst_87 {dimension_numbers = #tpu.dot_dimension_numbers<[1], [0], [0], [1], [0, 0, 1, 1], [], []>} : vector<4x16xf32>, vector<16x256xf32>, vector<4x256xf32> -> vector<4x256xf32>
    %149 = arith.addf %139, %148 : vector<4x256xf32>
    %c1_i32_88 = arith.constant 1 : i32
    %150 = tpu.dynamic_rotate %118 by %c1_i32_88 dim 1 : vector<16x256xf32>, i32 -> vector<16x256xf32>
    %c3_89 = arith.constant 3 : index
    %c0_90 = arith.constant 0 : index
    %151 = vector.load %arg7[%c3_89, %c0_90] : memref<9x256xf32, #tpu.memory_space<vmem>>, vector<1x256xf32>
    %152 = vector.shape_cast %151 : vector<1x256xf32> to vector<256xf32>
    %153 = vector.shape_cast %152 : vector<256xf32> to vector<1x256xf32>
    %154 = vector.broadcast %153 : vector<1x256xf32> to vector<16x256xf32>
    %155 = arith.mulf %150, %154 : vector<16x256xf32>
    %c3_91 = arith.constant 3 : index
    %c0_92 = arith.constant 0 : index
    %c0_93 = arith.constant 0 : index
    %156 = vector.load %arg6[%c3_91, %c0_92, %c0_93] : memref<9x4x16xf32, #tpu.memory_space<vmem>>, vector<1x4x16xf32>
    %157 = vector.shape_cast %156 : vector<1x4x16xf32> to vector<4x16xf32>
    %cst_94 = arith.constant dense<0.000000e+00> : vector<4x256xf32>
    %158 = tpu.matmul %157, %155, %cst_94 {dimension_numbers = #tpu.dot_dimension_numbers<[1], [0], [0], [1], [0, 0, 1, 1], [], []>} : vector<4x16xf32>, vector<16x256xf32>, vector<4x256xf32> -> vector<4x256xf32>
    %159 = arith.addf %149, %158 : vector<4x256xf32>
    %c4_95 = arith.constant 4 : index
    %c0_96 = arith.constant 0 : index
    %c0_97 = arith.constant 0 : index
    %160 = vector.load %arg6[%c4_95, %c0_96, %c0_97] : memref<9x4x16xf32, #tpu.memory_space<vmem>>, vector<1x4x16xf32>
    %161 = vector.shape_cast %160 : vector<1x4x16xf32> to vector<4x16xf32>
    %cst_98 = arith.constant dense<0.000000e+00> : vector<4x256xf32>
    %162 = tpu.matmul %161, %118, %cst_98 {dimension_numbers = #tpu.dot_dimension_numbers<[1], [0], [0], [1], [0, 0, 1, 1], [], []>} : vector<4x16xf32>, vector<16x256xf32>, vector<4x256xf32> -> vector<4x256xf32>
    %163 = arith.addf %159, %162 : vector<4x256xf32>
    %c255_i32_99 = arith.constant 255 : i32
    %164 = tpu.dynamic_rotate %118 by %c255_i32_99 dim 1 : vector<16x256xf32>, i32 -> vector<16x256xf32>
    %c5_100 = arith.constant 5 : index
    %c0_101 = arith.constant 0 : index
    %165 = vector.load %arg7[%c5_100, %c0_101] : memref<9x256xf32, #tpu.memory_space<vmem>>, vector<1x256xf32>
    %166 = vector.shape_cast %165 : vector<1x256xf32> to vector<256xf32>
    %167 = vector.shape_cast %166 : vector<256xf32> to vector<1x256xf32>
    %168 = vector.broadcast %167 : vector<1x256xf32> to vector<16x256xf32>
    %169 = arith.mulf %164, %168 : vector<16x256xf32>
    %c5_102 = arith.constant 5 : index
    %c0_103 = arith.constant 0 : index
    %c0_104 = arith.constant 0 : index
    %170 = vector.load %arg6[%c5_102, %c0_103, %c0_104] : memref<9x4x16xf32, #tpu.memory_space<vmem>>, vector<1x4x16xf32>
    %171 = vector.shape_cast %170 : vector<1x4x16xf32> to vector<4x16xf32>
    %cst_105 = arith.constant dense<0.000000e+00> : vector<4x256xf32>
    %172 = tpu.matmul %171, %169, %cst_105 {dimension_numbers = #tpu.dot_dimension_numbers<[1], [0], [0], [1], [0, 0, 1, 1], [], []>} : vector<4x16xf32>, vector<16x256xf32>, vector<4x256xf32> -> vector<4x256xf32>
    %173 = arith.addf %163, %172 : vector<4x256xf32>
    %c241_i32_106 = arith.constant 241 : i32
    %174 = tpu.dynamic_rotate %118 by %c241_i32_106 dim 1 : vector<16x256xf32>, i32 -> vector<16x256xf32>
    %c6_107 = arith.constant 6 : index
    %c0_108 = arith.constant 0 : index
    %175 = vector.load %arg7[%c6_107, %c0_108] : memref<9x256xf32, #tpu.memory_space<vmem>>, vector<1x256xf32>
    %176 = vector.shape_cast %175 : vector<1x256xf32> to vector<256xf32>
    %177 = vector.shape_cast %176 : vector<256xf32> to vector<1x256xf32>
    %178 = vector.broadcast %177 : vector<1x256xf32> to vector<16x256xf32>
    %179 = arith.mulf %174, %178 : vector<16x256xf32>
    %c6_109 = arith.constant 6 : index
    %c0_110 = arith.constant 0 : index
    %c0_111 = arith.constant 0 : index
    %180 = vector.load %arg6[%c6_109, %c0_110, %c0_111] : memref<9x4x16xf32, #tpu.memory_space<vmem>>, vector<1x4x16xf32>
    %181 = vector.shape_cast %180 : vector<1x4x16xf32> to vector<4x16xf32>
    %cst_112 = arith.constant dense<0.000000e+00> : vector<4x256xf32>
    %182 = tpu.matmul %181, %179, %cst_112 {dimension_numbers = #tpu.dot_dimension_numbers<[1], [0], [0], [1], [0, 0, 1, 1], [], []>} : vector<4x16xf32>, vector<16x256xf32>, vector<4x256xf32> -> vector<4x256xf32>
    %183 = arith.addf %173, %182 : vector<4x256xf32>
    %c240_i32_113 = arith.constant 240 : i32
    %184 = tpu.dynamic_rotate %118 by %c240_i32_113 dim 1 : vector<16x256xf32>, i32 -> vector<16x256xf32>
    %c7_114 = arith.constant 7 : index
    %c0_115 = arith.constant 0 : index
    %185 = vector.load %arg7[%c7_114, %c0_115] : memref<9x256xf32, #tpu.memory_space<vmem>>, vector<1x256xf32>
    %186 = vector.shape_cast %185 : vector<1x256xf32> to vector<256xf32>
    %187 = vector.shape_cast %186 : vector<256xf32> to vector<1x256xf32>
    %188 = vector.broadcast %187 : vector<1x256xf32> to vector<16x256xf32>
    %189 = arith.mulf %184, %188 : vector<16x256xf32>
    %c7_116 = arith.constant 7 : index
    %c0_117 = arith.constant 0 : index
    %c0_118 = arith.constant 0 : index
    %190 = vector.load %arg6[%c7_116, %c0_117, %c0_118] : memref<9x4x16xf32, #tpu.memory_space<vmem>>, vector<1x4x16xf32>
    %191 = vector.shape_cast %190 : vector<1x4x16xf32> to vector<4x16xf32>
    %cst_119 = arith.constant dense<0.000000e+00> : vector<4x256xf32>
    %192 = tpu.matmul %191, %189, %cst_119 {dimension_numbers = #tpu.dot_dimension_numbers<[1], [0], [0], [1], [0, 0, 1, 1], [], []>} : vector<4x16xf32>, vector<16x256xf32>, vector<4x256xf32> -> vector<4x256xf32>
    %193 = arith.addf %183, %192 : vector<4x256xf32>
    %c239_i32_120 = arith.constant 239 : i32
    %194 = tpu.dynamic_rotate %118 by %c239_i32_120 dim 1 : vector<16x256xf32>, i32 -> vector<16x256xf32>
    %c8_121 = arith.constant 8 : index
    %c0_122 = arith.constant 0 : index
    %195 = vector.load %arg7[%c8_121, %c0_122] : memref<9x256xf32, #tpu.memory_space<vmem>>, vector<1x256xf32>
    %196 = vector.shape_cast %195 : vector<1x256xf32> to vector<256xf32>
    %197 = vector.shape_cast %196 : vector<256xf32> to vector<1x256xf32>
    %198 = vector.broadcast %197 : vector<1x256xf32> to vector<16x256xf32>
    %199 = arith.mulf %194, %198 : vector<16x256xf32>
    %c8_123 = arith.constant 8 : index
    %c0_124 = arith.constant 0 : index
    %c0_125 = arith.constant 0 : index
    %200 = vector.load %arg6[%c8_123, %c0_124, %c0_125] : memref<9x4x16xf32, #tpu.memory_space<vmem>>, vector<1x4x16xf32>
    %201 = vector.shape_cast %200 : vector<1x4x16xf32> to vector<4x16xf32>
    %cst_126 = arith.constant dense<0.000000e+00> : vector<4x256xf32>
    %202 = tpu.matmul %201, %199, %cst_126 {dimension_numbers = #tpu.dot_dimension_numbers<[1], [0], [0], [1], [0, 0, 1, 1], [], []>} : vector<4x16xf32>, vector<16x256xf32>, vector<4x256xf32> -> vector<4x256xf32>
    %203 = arith.addf %193, %202 : vector<4x256xf32>
    %204 = tpu.concatenate %107, %203 in 0 : vector<4x256xf32>, vector<4x256xf32> -> vector<8x256xf32>
    %c1_127 = arith.constant 1 : index
    %c0_128 = arith.constant 0 : index
    %c0_129 = arith.constant 0 : index
    %205 = vector.load %arg8[%c1_127, %c0_128, %c0_129] : memref<2x8x256xf32, #tpu.memory_space<vmem>>, vector<1x8x256xf32>
    %206 = vector.shape_cast %205 : vector<1x8x256xf32> to vector<8x256xf32>
    %207 = vector.shape_cast %204 : vector<8x256xf32> to vector<1x8x256xf32>
    tpu.vector_store %arg8[%c1_127, %c0_128, %c0_129], %207 {strides = array<i32>} : memref<2x8x256xf32, #tpu.memory_space<vmem>>, vector<1x8x256xf32>,
    return
  }
  func.func @transform_0(%arg0: i32) -> (i32, i32, i32) {
    %c0_i32 = arith.constant 0 : i32
    %c0_i32_0 = arith.constant 0 : i32
    %c0_i32_1 = arith.constant 0 : i32
    return %arg0, %c0_i32, %c0_i32_0 : i32, i32, i32
  }
  func.func @transform_1(%arg0: i32) -> (i32, i32) {
    %c0_i32 = arith.constant 0 : i32
    %c0_i32_0 = arith.constant 0 : i32
    %c0_i32_1 = arith.constant 0 : i32
    return %c0_i32, %c0_i32_0 : i32, i32
  }
  func.func @transform_2(%arg0: i32) -> (i32, i32) {
    %c0_i32 = arith.constant 0 : i32
    %c0_i32_0 = arith.constant 0 : i32
    %c0_i32_1 = arith.constant 0 : i32
    return %c0_i32, %c0_i32_0 : i32, i32
  }
  func.func @transform_3(%arg0: i32) -> (i32, i32) {
    %c0_i32 = arith.constant 0 : i32
    %c0_i32_0 = arith.constant 0 : i32
    %c0_i32_1 = arith.constant 0 : i32
    return %c0_i32, %c0_i32_0 : i32, i32
  }
  func.func @transform_4(%arg0: i32) -> (i32, i32) {
    %c0_i32 = arith.constant 0 : i32
    %c0_i32_0 = arith.constant 0 : i32
    %c0_i32_1 = arith.constant 0 : i32
    return %c0_i32, %c0_i32_0 : i32, i32
  }
  func.func @transform_5(%arg0: i32) -> (i32, i32, i32) {
    %c0_i32 = arith.constant 0 : i32
    %c0_i32_0 = arith.constant 0 : i32
    %c0_i32_1 = arith.constant 0 : i32
    %c0_i32_2 = arith.constant 0 : i32
    return %c0_i32, %c0_i32_0, %c0_i32_1 : i32, i32, i32
  }
  func.func @transform_6(%arg0: i32) -> (i32, i32) {
    %c0_i32 = arith.constant 0 : i32
    %c0_i32_0 = arith.constant 0 : i32
    %c0_i32_1 = arith.constant 0 : i32
    return %c0_i32, %c0_i32_0 : i32, i32
  }
  func.func @transform_7(%arg0: i32) -> (i32, i32, i32) {
    %c0_i32 = arith.constant 0 : i32
    %c0_i32_0 = arith.constant 0 : i32
    %c0_i32_1 = arith.constant 0 : i32
    return %arg0, %c0_i32, %c0_i32_0 : i32, i32, i32
  }
}

</mosaic_0001>

<llo_original>
// kernel: tpu_custom_call.1
$region0: #{tpu_custom_call.1}
  #allocation0 [shape = 'u32[]', space=smem, size = 0x4, offset = 0x4, fixed_abs, tag = 'smem constant byte address 0x4 - core index']
  #allocation1 [shape = 'u32[144,128]{1,0:T(1,128)}', space=vmem, size = 0x12000, scoped, tag = 'internal scratch']
  %s0 = inlined_call_operand.hbm [shape: f32[4,4,256], index: 0, kind: input, shape index: {}]
  %s1 = inlined_call_operand.vmem [shape: f32[4,1], index: 1, kind: input, shape index: {}]
  %s2 = inlined_call_operand.vmem [shape: f32[4,1], index: 2, kind: input, shape index: {}]
  %s3 = inlined_call_operand.vmem [shape: f32[16,4], index: 3, kind: input, shape index: {}]
  %s4 = inlined_call_operand.vmem [shape: f32[16,1], index: 4, kind: input, shape index: {}]
  %s5 = inlined_call_operand.vmem [shape: f32[9,4,16], index: 5, kind: input, shape index: {}]
  %s6 = inlined_call_operand.hbm [shape: f32[9,256], index: 6, kind: input, shape index: {}]
  %s7 = inlined_call_operand.hbm [shape: f32[4,8,256], index: 7, kind: output, shape index: {}]
  %s8 = sld [smem:[#allocation0]]
  $region69: #{tpu_custom_call.1} parent=0
    _
  %s10 = ssub.s32 1, %s8
  %s11 = scalar_select 0, %s10, %s8
  $region1: #{tpu_custom_call.1} parent=0
    #allocation2 [shape = 'u8[16384]{0}', space=vmem, size = 0x4000, scoped, tag = 'input window, operand 0']
    #allocation3 [shape = 's32[2]{0}', space=sflag, size = 0x8, scoped, tag = 'scoped memory for tpu_custom_call.1']
    #allocation4 [shape = 's32[2]{0}', space=sflag, size = 0x8, scoped, tag = 'scoped memory for tpu_custom_call.1']
    #allocation5 [shape = 'u8[16384]{0}', space=vmem, size = 0x4000, scoped, tag = 'input window, operand 6, single buffered']
    #allocation6 [shape = 's32[1]{0}', space=sflag, size = 0x4, scoped, tag = 'scoped memory for tpu_custom_call.1']
    #allocation7 [shape = 'u8[32768]{0}', space=vmem, size = 0x8000, scoped, tag = 'output window, operand 0']
    %12 = vsyncpa [#allocation3], 0
    %s13 = scalar_lea.sflag [#allocation3], 1
    %14 = vsyncpa %s13, 0
    %15 = vsyncpa [#allocation6], 0
    %16 = vsyncpa [#allocation4], 0
    %s17 = scalar_lea.sflag [#allocation4], 1
    %18 = vsyncpa %s17, 0
    loop: start=0, step=1, limit=4
    $region2: #{tpu_custom_call.1} parent=1 // loop_pre_header
      _
    $region3: #{tpu_custom_call.1} parent=1 // loop_header
      %s20 = sphi 0, %s24
      %p21 = scmp.ge.s32.totalorder %s20, 4
      %s30 = sphi 0, %s32
      %s33 = sphi 0, %s30
      %s34 = sphi 0, %s33
      %s50 = sphi 0, %s34
      %s54 = sphi 0, %s54
      %s56 = sphi 0, %s54
      %s57 = sphi 0, %s56
      %s71 = sphi 0, %s57
      %s75 = sphi 0, %s75
      %s77 = sphi 0, %s75
      %s78 = sphi 0, %s77
      %s92 = sphi 0, %s78
      %s96 = sphi 0, %s96
      %s98 = sphi 0, %s96
      %s99 = sphi 0, %s98
      %s113 = sphi 0, %s99
      %s117 = sphi 0, %s117
      %s119 = sphi 0, %s117
      %s120 = sphi 0, %s119
      %s134 = sphi 0, %s120
      %s138 = sphi 0, %s138
      %s140 = sphi 0, %s138
      %s141 = sphi 0, %s140
      %s155 = sphi 0, %s141
      %s159 = sphi 0, %s159
      %s161 = sphi 0, %s159
      %s162 = sphi 0, %s161
      %s176 = sphi 0, %s162
      %s182 = sphi 0, %s184
      %s185 = sphi 0, %s182
      %s186 = sphi 0, %s185
      %s202 = sphi 0, %s186
    $region4: #{tpu_custom_call.1} parent=1 // loop_header_branch
      %23 = sbr.rel (%p21) target = $region8
    $region5: #{tpu_custom_call.1} parent=1 // loop_body
      %s25 = ssub.s32 %s20, 1
      %s26 = ssub.s32 %s20, 2
      %s27 = sadd.s32 %s20, 1
      %s28 = ssub.s32 %s20, %s27
      %p29 = scmp.eq.s32.totalorder %s28, 0
      %s31 = sadd.s32 %s30, 1
      %s32 = scalar_select %p29, %s30, %s31
      %p35 = pneg %p29
      %p36 = scmp.eq.s32.totalorder %s20, 1
      %p37 = por %p35, %p36
      %p38 = scmp.ne.s32.totalorder %s30, %s33
      %p39 = scmp.eq.s32.totalorder %s20, 0
      %p40 = por %p38, %p39
      %p41 = scmp.ne.s32.totalorder %s30, %s33
      %p42 = scmp.eq.s32.totalorder %s25, 1
      %p43 = por %p41, %p42
      %p44 = scmp.ne.s32.totalorder %s33, %s34
      %p45 = scmp.eq.s32.totalorder %s25, 0
      %p46 = por %p44, %p45
      %p47 = scmp.ne.s32.totalorder %s33, %s34
      %p48 = scmp.eq.s32.totalorder %s26, 1
      %p49 = por %p47, %p48
      %p51 = scmp.ne.s32.totalorder %s34, %s50
      %p52 = scmp.eq.s32.totalorder %s26, 0
      %p53 = por %p51, %p52
      %s55 = sadd.s32 %s54, 1
      %p58 = scmp.eq.s32.totalorder %s20, 1
      %p59 = scmp.ne.s32.totalorder %s54, %s56
      %p60 = scmp.eq.s32.totalorder %s20, 0
      %p61 = por %p59, %p60
      %p62 = scmp.ne.s32.totalorder %s54, %s56
      %p63 = scmp.eq.s32.totalorder %s25, 1
      %p64 = por %p62, %p63
      %p65 = scmp.ne.s32.totalorder %s56, %s57
      %p66 = scmp.eq.s32.totalorder %s25, 0
      %p67 = por %p65, %p66
      %p68 = scmp.ne.s32.totalorder %s56, %s57
      %p69 = scmp.eq.s32.totalorder %s26, 1
      %p70 = por %p68, %p69
      %p72 = scmp.ne.s32.totalorder %s57, %s71
      %p73 = scmp.eq.s32.totalorder %s26, 0
      %p74 = por %p72, %p73
      %s76 = sadd.s32 %s75, 1
      %p79 = scmp.eq.s32.totalorder %s20, 1
      %p80 = scmp.ne.s32.totalorder %s75, %s77
      %p81 = scmp.eq.s32.totalorder %s20, 0
      %p82 = por %p80, %p81
      %p83 = scmp.ne.s32.totalorder %s75, %s77
      %p84 = scmp.eq.s32.totalorder %s25, 1
      %p85 = por %p83, %p84
      %p86 = scmp.ne.s32.totalorder %s77, %s78
      %p87 = scmp.eq.s32.totalorder %s25, 0
      %p88 = por %p86, %p87
      %p89 = scmp.ne.s32.totalorder %s77, %s78
      %p90 = scmp.eq.s32.totalorder %s26, 1
      %p91 = por %p89, %p90
      %p93 = scmp.ne.s32.totalorder %s78, %s92
      %p94 = scmp.eq.s32.totalorder %s26, 0
      %p95 = por %p93, %p94
      %s97 = sadd.s32 %s96, 1
      %p100 = scmp.eq.s32.totalorder %s20, 1
      %p101 = scmp.ne.s32.totalorder %s96, %s98
      %p102 = scmp.eq.s32.totalorder %s20, 0
      %p103 = por %p101, %p102
      %p104 = scmp.ne.s32.totalorder %s96, %s98
      %p105 = scmp.eq.s32.totalorder %s25, 1
      %p106 = por %p104, %p105
      %p107 = scmp.ne.s32.totalorder %s98, %s99
      %p108 = scmp.eq.s32.totalorder %s25, 0
      %p109 = por %p107, %p108
      %p110 = scmp.ne.s32.totalorder %s98, %s99
      %p111 = scmp.eq.s32.totalorder %s26, 1
      %p112 = por %p110, %p111
      %p114 = scmp.ne.s32.totalorder %s99, %s113
      %p115 = scmp.eq.s32.totalorder %s26, 0
      %p116 = por %p114, %p115
      %s118 = sadd.s32 %s117, 1
      %p121 = scmp.eq.s32.totalorder %s20, 1
      %p122 = scmp.ne.s32.totalorder %s117, %s119
      %p123 = scmp.eq.s32.totalorder %s20, 0
      %p124 = por %p122, %p123
      %p125 = scmp.ne.s32.totalorder %s117, %s119
      %p126 = scmp.eq.s32.totalorder %s25, 1
      %p127 = por %p125, %p126
      %p128 = scmp.ne.s32.totalorder %s119, %s120
      %p129 = scmp.eq.s32.totalorder %s25, 0
      %p130 = por %p128, %p129
      %p131 = scmp.ne.s32.totalorder %s119, %s120
      %p132 = scmp.eq.s32.totalorder %s26, 1
      %p133 = por %p131, %p132
      %p135 = scmp.ne.s32.totalorder %s120, %s134
      %p136 = scmp.eq.s32.totalorder %s26, 0
      %p137 = por %p135, %p136
      %s139 = sadd.s32 %s138, 1
      %p142 = scmp.eq.s32.totalorder %s20, 1
      %p143 = scmp.ne.s32.totalorder %s138, %s140
      %p144 = scmp.eq.s32.totalorder %s20, 0
      %p145 = por %p143, %p144
      %p146 = scmp.ne.s32.totalorder %s138, %s140
      %p147 = scmp.eq.s32.totalorder %s25, 1
      %p148 = por %p146, %p147
      %p149 = scmp.ne.s32.totalorder %s140, %s141
      %p150 = scmp.eq.s32.totalorder %s25, 0
      %p151 = por %p149, %p150
      %p152 = scmp.ne.s32.totalorder %s140, %s141
      %p153 = scmp.eq.s32.totalorder %s26, 1
      %p154 = por %p152, %p153
      %p156 = scmp.ne.s32.totalorder %s141, %s155
      %p157 = scmp.eq.s32.totalorder %s26, 0
      %p158 = por %p156, %p157
      %s160 = sadd.s32 %s159, 1
      %p163 = scmp.eq.s32.totalorder %s20, 1
      %p164 = scmp.ne.s32.totalorder %s159, %s161
      %p165 = scmp.eq.s32.totalorder %s20, 0
      %p166 = por %p164, %p165
      %p167 = scmp.ne.s32.totalorder %s159, %s161
      %p168 = scmp.eq.s32.totalorder %s25, 1
      %p169 = por %p167, %p168
      %p170 = scmp.ne.s32.totalorder %s161, %s162
      %p171 = scmp.eq.s32.totalorder %s25, 0
      %p172 = por %p170, %p171
      %p173 = scmp.ne.s32.totalorder %s161, %s162
      %p174 = scmp.eq.s32.totalorder %s26, 1
      %p175 = por %p173, %p174
      %p177 = scmp.ne.s32.totalorder %s162, %s176
      %p178 = scmp.eq.s32.totalorder %s26, 0
      %p179 = por %p177, %p178
      %s180 = ssub.s32 %s20, %s27
      %p181 = scmp.eq.s32.totalorder %s180, 0
      %s183 = sadd.s32 %s182, 1
      %s184 = scalar_select %p181, %s182, %s183
      %p187 = pneg %p181
      %p188 = scmp.eq.s32.totalorder %s20, 1
      %p189 = por %p187, %p188
      %p190 = scmp.ne.s32.totalorder %s182, %s185
      %p191 = scmp.eq.s32.totalorder %s20, 0
      %p192 = por %p190, %p191
      %p193 = scmp.ne.s32.totalorder %s182, %s185
      %p194 = scmp.eq.s32.totalorder %s25, 1
      %p195 = por %p193, %p194
      %p196 = scmp.ne.s32.totalorder %s185, %s186
      %p197 = scmp.eq.s32.totalorder %s25, 0
      %p198 = por %p196, %p197
      %p199 = scmp.ne.s32.totalorder %s185, %s186
      %p200 = scmp.eq.s32.totalorder %s26, 1
      %p201 = por %p199, %p200
      %p203 = scmp.ne.s32.totalorder %s186, %s202
      %p204 = scmp.eq.s32.totalorder %s26, 0
      %p205 = por %p203, %p204
      %p206 = scmp.le.s32.totalorder 1, %s20
      %p207 = scmp.lt.s32.totalorder %s20, 3
      %p208 = pnand %p206, %p207
      %p209 = pneg %p208
      // Predicated region
      $region9: #{tpu_custom_call.1} parent=5 // pred_check
        _
      $region10: #{tpu_custom_call.1} parent=5 // pred_check_branch
        %211 = sbr.rel (%p208) target = $region12
      $region11: #{tpu_custom_call.1} parent=5 // pred_region
        %s212 = ssub.s32 %s20, 1
        // Predicated region
        $region13: #{tpu_custom_call.1} parent=11 // pred_check
          %p213 = pneg %p67
        $region14: #{tpu_custom_call.1} parent=11 // pred_check_branch
          %215 = sbr.rel (%p213) target = $region16
        $region15: #{tpu_custom_call.1} parent=11 // pred_region
          _
        $region16: #{tpu_custom_call.1} parent=11 // pred_fallthru
          _
        // Predicated region
        $region17: #{tpu_custom_call.1} parent=11 // pred_check
          %p216 = pneg %p88
        $region18: #{tpu_custom_call.1} parent=11 // pred_check_branch
          %218 = sbr.rel (%p216) target = $region20
        $region19: #{tpu_custom_call.1} parent=11 // pred_region
          _
        $region20: #{tpu_custom_call.1} parent=11 // pred_fallthru
          _
        // Predicated region
        $region21: #{tpu_custom_call.1} parent=11 // pred_check
          %p219 = pneg %p109
        $region22: #{tpu_custom_call.1} parent=11 // pred_check_branch
          %221 = sbr.rel (%p219) target = $region24
        $region23: #{tpu_custom_call.1} parent=11 // pred_region
          _
        $region24: #{tpu_custom_call.1} parent=11 // pred_fallthru
          _
        // Predicated region
        $region25: #{tpu_custom_call.1} parent=11 // pred_check
          %p222 = pneg %p130
        $region26: #{tpu_custom_call.1} parent=11 // pred_check_branch
          %224 = sbr.rel (%p222) target = $region28
        $region27: #{tpu_custom_call.1} parent=11 // pred_region
          _
        $region28: #{tpu_custom_call.1} parent=11 // pred_fallthru
          _
        // Predicated region
        $region29: #{tpu_custom_call.1} parent=11 // pred_check
          %p225 = pneg %p151
        $region30: #{tpu_custom_call.1} parent=11 // pred_check_branch
          %227 = sbr.rel (%p225) target = $region32
        $region31: #{tpu_custom_call.1} parent=11 // pred_region
          _
        $region32: #{tpu_custom_call.1} parent=11 // pred_fallthru
          _
        // Predicated region
        $region33: #{tpu_custom_call.1} parent=11 // pred_check
          %p228 = pneg %p172
        $region34: #{tpu_custom_call.1} parent=11 // pred_check_branch
          %230 = sbr.rel (%p228) target = $region36
        $region35: #{tpu_custom_call.1} parent=11 // pred_region
          %s232 = ssub.s32 512, 512
          %233 = vsyncadd [#allocation6], %s232
          %s234 = sshll.u32 [#allocation5], 4
          %s235 = int_to_ptr.vmem [resolvable:$true] %s234
          %240 = dma.hbm_to_vmem [thread:$0]  %s6, 512, %s235, [#allocation6], 256, 256, 16
        $region36: #{tpu_custom_call.1} parent=11 // pred_fallthru
          _
      $region12: #{tpu_custom_call.1} parent=5 // pred_fallthru
        _
      %p241 = scmp.lt.s32.totalorder %s20, 2
      // Predicated region
      $region37: #{tpu_custom_call.1} parent=5 // pred_check
        %p242 = pneg %p241
      $region38: #{tpu_custom_call.1} parent=5 // pred_check_branch
        %244 = sbr.rel (%p242) target = $region40
      $region39: #{tpu_custom_call.1} parent=5 // pred_region
        // Predicated region
        $region41: #{tpu_custom_call.1} parent=39 // pred_check
          %p245 = pneg %p40
        $region42: #{tpu_custom_call.1} parent=39 // pred_check_branch
          %247 = sbr.rel (%p245) target = $region44
        $region43: #{tpu_custom_call.1} parent=39 // pred_region
          %s248 = sand.u32 %s30, 1
          %s249 = scalar_lea.sflag [#allocation3], %s248
          %s250 = sand.u32 %s30, 1
          %s251 = smul.addr %s250, 16
          %s252 = scalar_lea.vmem [#allocation2], %s251
          %s253 = smul.u32 2, %s20
          %s255 = ssub.s32 256, 256
          %256 = vsyncadd %s249, %s255
          %s257 = smul.addr %s253, 2
          %s258 = smul.addr %s257, 64
          %s259 = scalar_lea.hbm %s0, %s258
          %s260 = sshll.u32 %s252, 4
          %s261 = int_to_ptr.vmem [resolvable:$true] %s260
          %266 = dma.hbm_to_vmem [thread:$0]  %s259, 256, %s261, %s249, 128, 128, 8
        $region44: #{tpu_custom_call.1} parent=39 // pred_fallthru
          _
      $region40: #{tpu_custom_call.1} parent=5 // pred_fallthru
        _
      %p267 = scmp.le.s32.totalorder 1, %s20
      %p268 = scmp.lt.s32.totalorder %s20, 3
      %p269 = pnand %p267, %p268
      %p270 = pneg %p269
      // Predicated region
      $region45: #{tpu_custom_call.1} parent=5 // pred_check
        _
      $region46: #{tpu_custom_call.1} parent=5 // pred_check_branch
        %272 = sbr.rel (%p269) target = $region48
      $region47: #{tpu_custom_call.1} parent=5 // pred_region
        %s273 = ssub.s32 %s20, 1
        %s274 = sand.u32 %s33, 1
        %s275 = scalar_lea.sflag [#allocation3], %s274
        %s276 = sand.u32 %s33, 1
        %s277 = smul.addr %s276, 16
        %s278 = scalar_lea.vmem [#allocation2], %s277
        // Predicated region
        $region49: #{tpu_custom_call.1} parent=47 // pred_check
          %p279 = pneg %p46
        $region50: #{tpu_custom_call.1} parent=47 // pred_check_branch
          %281 = sbr.rel (%p279) target = $region52
        $region51: #{tpu_custom_call.1} parent=47 // pred_region
          %282 = dma.done %s275, 256
        $region52: #{tpu_custom_call.1} parent=47 // pred_fallthru
          _
        // Predicated region
        $region53: #{tpu_custom_call.1} parent=47 // pred_check
          %p283 = pneg %p172
        $region54: #{tpu_custom_call.1} parent=47 // pred_check_branch
          %285 = sbr.rel (%p283) target = $region56
        $region55: #{tpu_custom_call.1} parent=47 // pred_region
          %286 = dma.done [#allocation6], 512
        $region56: #{tpu_custom_call.1} parent=47 // pred_fallthru
          _
        %s287 = sand.u32 %s33, 1
        %s288 = scalar_lea.sflag [#allocation3], %s287
        %s289 = sand.u32 %s33, 1
        %s290 = smul.addr %s289, 16
        %s291 = scalar_lea.vmem [#allocation2], %s290
        %p292 = pneg %p46
        %p293 = pneg %p43
        %p294 = pneg %p67
        %p295 = pneg %p64
        %p296 = pneg %p88
        %p297 = pneg %p85
        %p298 = pneg %p109
        %p299 = pneg %p106
        %p300 = pneg %p130
        %p301 = pneg %p127
        %p302 = pneg %p151
        %p303 = pneg %p148
        %p304 = pneg %p172
        %p305 = pneg %p169
        %p306 = pneg %p198
        %p307 = pneg %p195
        %s308 = sand.u32 %s185, 1
        %s309 = scalar_lea.sflag [#allocation4], %s308
        %s310 = sand.u32 %s185, 1
        %s311 = smul.addr %s310, 32
        %s312 = scalar_lea.vmem [#allocation7], %s311
        %s313 = smul.u32 2, %s25
        %s314 = smul.u32 2, %s25
        %v315 = vld [vmem:[%s1] sm:$0xf]
        %v316 = vld [vmem:[%s2] sm:$0xf]
        %v317 = vld [vmem:[%s4] sm:$0xff]
        %v318 = vld [vmem:[%s4 + $0x8] sm:$0xff]
        %v319 = vld [vmem:[%s3] sm:$0xff]
        %v320 = vld [vmem:[%s3 + $0x8] sm:$0xff]
        %v321 = vld [vmem:[%s278] sm:$0xff]
        %323 = vset.pattern.permute.xlu0 0
        %324 = vperm.xlu0 %323, %v315
        %v325 = vpop.permute.xlu0 %324
        %v327 = vunpack.c.l.s4 839922192
        %v328 = vunpack.c.0.s8 %v327
        %v329 = vlaneseq
        %v330 = vshrl.u32 %v329, 7
        %v331 = vsub.s32 %v328, %v330
        %v332 = vrot.slane %v325, %v331
        %v334 = vmul.f32 %v321, %v332
        %336 = vset.pattern.permute.xlu0 0
        %337 = vperm.xlu0 %336, %v316
        %v338 = vpop.permute.xlu0 %337
        %v340 = vunpack.c.l.s4 839922192
        %v341 = vunpack.c.0.s8 %v340
        %v342 = vlaneseq
        %v343 = vshrl.u32 %v342, 7
        %v344 = vsub.s32 %v341, %v343
        %v345 = vrot.slane %v338, %v344
        %v347 = vadd.f32 %v334, %v345
        %v348 = vmax.f32 %v347, 0.0
        %350 = vset.pattern.permute.xlu0 0
        %351 = vperm.xlu0 %350, %v317
        %v352 = vpop.permute.xlu0 %351
        %355 = vset.pattern.permute.xlu0 0
        %356 = vperm.xlu0 %355, %v318
        %v357 = vpop.permute.xlu0 %356
        %v360 = vcombine.high %v348, %v348
        %vm361 = vcmask 31744
        %v363 = vsel %vm361, %v319, 0
        %v366 = vsel %vm361, %v320, 0
        %vm368 = vcmask 1043456
        %v369 = vsel %vm368, %v348, 0
        %v371 = vsel %vm368, %v360, 0
        %373 = vmatprep.subr.mxu0 0.0
        %374 = vmatpush1.msra.mxu0 0.0
        %375 = vmatprep.subr.mxu0 0.0
        %376 = vmatpush1.msra.mxu0 0.0
        %377 = vmatprep.subr.mxu0 0.0
        %378 = vmatpush1.msra.mxu0 0.0
        %379 = vmatprep.subr.mxu0 0.0
        %380 = vmatpush1.msra.mxu0 0.0
        %381 = vmatprep.subr.mxu0 0.0
        %382 = vmatpush1.msra.mxu0 0.0
        %383 = vmatprep.subr.mxu0 0.0
        %384 = vmatpush1.msra.mxu0 0.0
        %385 = vmatprep.subr.mxu0 0.0
        %386 = vmatpush1.msra.mxu0 0.0
        %387 = vmatprep.subr.mxu0 0.0
        %388 = vmatpush1.msra.mxu0 0.0
        %389 = vmatprep.subr.mxu0 0.0
        %390 = vmatpush1.msra.mxu0 0.0
        %391 = vmatprep.subr.mxu0 0.0
        %392 = vmatpush1.msra.mxu0 0.0
        %393 = vmatprep.subr.mxu0 0.0
        %394 = vmatpush1.msra.mxu0 0.0
        %395 = vmatprep.subr.mxu0 0.0
        %396 = vmatpush1.msra.mxu0 0.0
        %397 = vmatprep.subr.mxu0 0.0
        %398 = vmatpush1.msra.mxu0 0.0
        %399 = vmatprep.subr.mxu0 0.0
        %400 = vmatpush1.msra.mxu0 0.0
        %401 = vmatprep.subr.mxu0 0.0
        %402 = vmatpush1.msra.mxu0 0.0
        %403 = vmatprep.subr.mxu0 %v371
        %404 = vmatpush1.msra.mxu0 %v369
        %405 = vmatprep.subr.mxu0 0.0
        %406 = vmatpush2.msra.mxu0 0.0
        %407 = vmatprep.subr.mxu0 0.0
        %408 = vmatpush2.msra.mxu0 0.0
        %409 = vmatprep.subr.mxu0 0.0
        %410 = vmatpush2.msra.mxu0 0.0
        %411 = vmatprep.subr.mxu0 0.0
        %412 = vmatpush2.msra.mxu0 0.0
        %413 = vmatprep.subr.mxu0 0.0
        %414 = vmatpush2.msra.mxu0 0.0
        %415 = vmatprep.subr.mxu0 0.0
        %416 = vmatpush2.msra.mxu0 0.0
        %417 = vmatprep.subr.mxu0 0.0
        %418 = vmatpush2.msra.mxu0 0.0
        %419 = vmatprep.subr.mxu0 0.0
        %420 = vmatpush2.msra.mxu0 0.0
        %421 = vmatprep.subr.mxu0 0.0
        %422 = vmatpush2.msra.mxu0 0.0
        %423 = vmatprep.subr.mxu0 0.0
        %424 = vmatpush2.msra.mxu0 0.0
        %425 = vmatprep.subr.mxu0 0.0
        %426 = vmatpush2.msra.mxu0 0.0
        %427 = vmatprep.subr.mxu0 0.0
        %428 = vmatpush2.msra.mxu0 0.0
        %429 = vmatprep.subr.mxu0 0.0
        %430 = vmatpush2.msra.mxu0 0.0
        %431 = vmatprep.subr.mxu0 0.0
        %432 = vmatpush2.msra.mxu0 0.0
        %433 = vmatprep.subr.mxu0 0.0
        %434 = vmatpush2.msra.mxu0 0.0
        %435 = vmatprep.subr.mxu0 0.0
        %436 = vmatpush2.msra.mxu0 0.0
        %437 = vmatprep.mubr.f32.mxu0 0.0
        %438 = vmatmul.mubr.f32.gmra.mxu0 %v363
        %v439 = vpop.f32.mrf.mxu0
        %v440 = vadd.f32 %v352, %v439
        %v441 = vpop.f32.mrf.mxu0
        %v442 = vadd.f32 %v352, %v441
        %443 = vmatprep.mubr.f32.mxu0 0.0
        %444 = vmatmul.mubr.f32.gmra.mxu0 %v366
        %v445 = vpop.f32.mrf.mxu0
        %v446 = vadd.f32 %v357, %v445
        %v447 = vpop.f32.mrf.mxu0
        %v448 = vadd.f32 %v357, %v447
        %449 = vdwg.mxu0
        %v450 = vmax.f32 %v440, 0.0
        %v451 = vmax.f32 %v442, 0.0
        %v452 = vmax.f32 %v446, 0.0
        %v453 = vmax.f32 %v448, 0.0
        %454 = vrot.lane.b32.xlu0 %v450, 17
        %v455 = vpop.permute.xlu0 %454
        %456 = vrot.lane.b32.xlu0 %v452, 17
        %v457 = vpop.permute.xlu0 %456
        %458 = vrot.lane.b32.xlu0 %v451, 17
        %v459 = vpop.permute.xlu0 %458
        %460 = vrot.lane.b32.xlu0 %v453, 17
        %v461 = vpop.permute.xlu0 %460
        %v462 = vlaneseq
        %v463 = vand.u32 %v462, 127
        %vm464 = vcmp.lt.s32.totalorder %v463, 17
        %v465 = vsel %vm464, %v455, %v459
        %v466 = vsel %vm464, %v457, %v461
        %v467 = vsel %vm464, %v459, %v455
        %v468 = vsel %vm464, %v461, %v457
        %v469 = vld [vmem:[#allocation5] ss:$8 sm:$0x3]
        %v471 = vlaneseq
        %v472 = vshrl.u32 %v471, 7
        %v473 = vsub.s32 0, %v472
        %v474 = vrot.slane %v469, %v473
        %v475 = vlaneseq
        %v476 = vshrl.u32 %v475, 7
        %v477 = vsub.s32 1, %v476
        %v478 = vrot.slane %v469, %v477
        %v481 = vmul.f32 %v467, %v474
        %v482 = vmul.f32 %v465, %v478
        %v483 = vmul.f32 %v468, %v474
        %v484 = vmul.f32 %v466, %v478
        %v485 = vld [vmem:[%s5] sm:$0xf]
        %486 = vrot.lane.b32.xlu0 %v450, 16
        %v487 = vpop.permute.xlu0 %486
        %488 = vrot.lane.b32.xlu0 %v452, 16
        %v489 = vpop.permute.xlu0 %488
        %490 = vrot.lane.b32.xlu0 %v451, 16
        %v491 = vpop.permute.xlu0 %490
        %492 = vrot.lane.b32.xlu0 %v453, 16
        %v493 = vpop.permute.xlu0 %492
        %vm494 = vcmp.lt.s32.totalorder %v463, 16
        %v495 = vsel %vm494, %v487, %v491
        %v496 = vsel %vm494, %v489, %v493
        %v497 = vsel %vm494, %v491, %v487
        %v498 = vsel %vm494, %v493, %v489
        %s499 = scalar_lea.vmem [#allocation5], 1
        %v500 = vld [vmem:[%s499] ss:$8 sm:$0x3]
        %v502 = vlaneseq
        %v503 = vshrl.u32 %v502, 7
        %v504 = vsub.s32 0, %v503
        %v505 = vrot.slane %v500, %v504
        %v506 = vlaneseq
        %v507 = vshrl.u32 %v506, 7
        %v508 = vsub.s32 1, %v507
        %v509 = vrot.slane %v500, %v508
        %v512 = vmul.f32 %v497, %v505
        %v513 = vmul.f32 %v495, %v509
        %v514 = vmul.f32 %v498, %v505
        %v515 = vmul.f32 %v496, %v509
        %s516 = scalar_lea.vmem %s5, 4
        %v517 = vld [vmem:[%s516] sm:$0xf]
        %vm518 = vcmask 130048
        %v520 = vsel %vm518, %v517, 0
        %522 = vmatprep.subr.mxu0 0.0
        %523 = vmatpush1.msra.mxu0 0.0
        %524 = vmatprep.subr.mxu0 0.0
        %525 = vmatpush1.msra.mxu0 0.0
        %526 = vmatprep.subr.mxu0 0.0
        %527 = vmatpush1.msra.mxu0 0.0
        %528 = vmatprep.subr.mxu0 0.0
        %529 = vmatpush1.msra.mxu0 0.0
        %530 = vmatprep.subr.mxu0 0.0
        %531 = vmatpush1.msra.mxu0 0.0
        %532 = vmatprep.subr.mxu0 0.0
        %533 = vmatpush1.msra.mxu0 0.0
        %534 = vmatprep.subr.mxu0 0.0
        %535 = vmatpush1.msra.mxu0 0.0
        %536 = vmatprep.subr.mxu0 0.0
        %537 = vmatpush1.msra.mxu0 0.0
        %538 = vmatprep.subr.mxu0 0.0
        %539 = vmatpush1.msra.mxu0 0.0
        %540 = vmatprep.subr.mxu0 0.0
        %541 = vmatpush1.msra.mxu0 0.0
        %542 = vmatprep.subr.mxu0 0.0
        %543 = vmatpush1.msra.mxu0 0.0
        %544 = vmatprep.subr.mxu0 0.0
        %545 = vmatpush1.msra.mxu0 0.0
        %546 = vmatprep.subr.mxu0 0.0
        %547 = vmatpush1.msra.mxu0 0.0
        %548 = vmatprep.subr.mxu0 0.0
        %549 = vmatpush1.msra.mxu0 0.0
        %550 = vmatprep.subr.mxu0 %v515
        %551 = vmatpush1.msra.mxu0 %v514
        %552 = vmatprep.subr.mxu0 %v513
        %553 = vmatpush1.msra.mxu0 %v512
        %554 = vmatprep.subr.mxu0 0.0
        %555 = vmatpush2.msra.mxu0 0.0
        %556 = vmatprep.subr.mxu0 0.0
        %557 = vmatpush2.msra.mxu0 0.0
        %558 = vmatprep.subr.mxu0 0.0
        %559 = vmatpush2.msra.mxu0 0.0
        %560 = vmatprep.subr.mxu0 0.0
        %561 = vmatpush2.msra.mxu0 0.0
        %562 = vmatprep.subr.mxu0 0.0
        %563 = vmatpush2.msra.mxu0 0.0
        %564 = vmatprep.subr.mxu0 0.0
        %565 = vmatpush2.msra.mxu0 0.0
        %566 = vmatprep.subr.mxu0 0.0
        %567 = vmatpush2.msra.mxu0 0.0
        %568 = vmatprep.subr.mxu0 0.0
        %569 = vmatpush2.msra.mxu0 0.0
        %570 = vmatprep.subr.mxu0 0.0
        %571 = vmatpush2.msra.mxu0 0.0
        %572 = vmatprep.subr.mxu0 0.0
        %573 = vmatpush2.msra.mxu0 0.0
        %574 = vmatprep.subr.mxu0 0.0
        %575 = vmatpush2.msra.mxu0 0.0
        %576 = vmatprep.subr.mxu0 0.0
        %577 = vmatpush2.msra.mxu0 0.0
        %578 = vmatprep.subr.mxu0 0.0
        %579 = vmatpush2.msra.mxu0 0.0
        %580 = vmatprep.subr.mxu0 0.0
        %581 = vmatpush2.msra.mxu0 0.0
        %582 = vmatprep.subr.mxu0 0.0
        %583 = vmatpush2.msra.mxu0 0.0
        %584 = vmatprep.subr.mxu0 0.0
        %585 = vmatpush2.msra.mxu0 0.0
        %586 = vmatprep.mubr.f32.mxu0 0.0
        %587 = vmatmul.mubr.f32.gmra.mxu0 %v520
        %v588 = vpop.f32.mrf.mxu0
        %v589 = vadd.f32 0.0, %v588
        %v590 = vpop.f32.mrf.mxu0
        %v591 = vadd.f32 0.0, %v590
        %592 = vdwg.mxu0
        %v594 = vsel %vm518, %v485, 0
        %596 = vmatprep.subr.mxu0 0.0
        %597 = vmatpush1.msra.mxu0 0.0
        %598 = vmatprep.subr.mxu0 0.0
        %599 = vmatpush1.msra.mxu0 0.0
        %600 = vmatprep.subr.mxu0 0.0
        %601 = vmatpush1.msra.mxu0 0.0
        %602 = vmatprep.subr.mxu0 0.0
        %603 = vmatpush1.msra.mxu0 0.0
        %604 = vmatprep.subr.mxu0 0.0
        %605 = vmatpush1.msra.mxu0 0.0
        %606 = vmatprep.subr.mxu0 0.0
        %607 = vmatpush1.msra.mxu0 0.0
        %608 = vmatprep.subr.mxu0 0.0
        %609 = vmatpush1.msra.mxu0 0.0
        %610 = vmatprep.subr.mxu0 0.0
        %611 = vmatpush1.msra.mxu0 0.0
        %612 = vmatprep.subr.mxu0 0.0
        %613 = vmatpush1.msra.mxu0 0.0
        %614 = vmatprep.subr.mxu0 0.0
        %615 = vmatpush1.msra.mxu0 0.0
        %616 = vmatprep.subr.mxu0 0.0
        %617 = vmatpush1.msra.mxu0 0.0
        %618 = vmatprep.subr.mxu0 0.0
        %619 = vmatpush1.msra.mxu0 0.0
        %620 = vmatprep.subr.mxu0 0.0
        %621 = vmatpush1.msra.mxu0 0.0
        %622 = vmatprep.subr.mxu0 0.0
        %623 = vmatpush1.msra.mxu0 0.0
        %624 = vmatprep.subr.mxu0 %v484
        %625 = vmatpush1.msra.mxu0 %v483
        %626 = vmatprep.subr.mxu0 %v482
        %627 = vmatpush1.msra.mxu0 %v481
        %628 = vmatprep.subr.mxu0 0.0
        %629 = vmatpush2.msra.mxu0 0.0
        %630 = vmatprep.subr.mxu0 0.0
        %631 = vmatpush2.msra.mxu0 0.0
        %632 = vmatprep.subr.mxu0 0.0
        %633 = vmatpush2.msra.mxu0 0.0
        %634 = vmatprep.subr.mxu0 0.0
        %635 = vmatpush2.msra.mxu0 0.0
        %636 = vmatprep.subr.mxu0 0.0
        %637 = vmatpush2.msra.mxu0 0.0
        %638 = vmatprep.subr.mxu0 0.0
        %639 = vmatpush2.msra.mxu0 0.0
        %640 = vmatprep.subr.mxu0 0.0
        %641 = vmatpush2.msra.mxu0 0.0
        %642 = vmatprep.subr.mxu0 0.0
        %643 = vmatpush2.msra.mxu0 0.0
        %644 = vmatprep.subr.mxu0 0.0
        %645 = vmatpush2.msra.mxu0 0.0
        %646 = vmatprep.subr.mxu0 0.0
        %647 = vmatpush2.msra.mxu0 0.0
        %648 = vmatprep.subr.mxu0 0.0
        %649 = vmatpush2.msra.mxu0 0.0
        %650 = vmatprep.subr.mxu0 0.0
        %651 = vmatpush2.msra.mxu0 0.0
        %652 = vmatprep.subr.mxu0 0.0
        %653 = vmatpush2.msra.mxu0 0.0
        %654 = vmatprep.subr.mxu0 0.0
        %655 = vmatpush2.msra.mxu0 0.0
        %656 = vmatprep.subr.mxu0 0.0
        %657 = vmatpush2.msra.mxu0 0.0
        %658 = vmatprep.subr.mxu0 0.0
        %659 = vmatpush2.msra.mxu0 0.0
        %660 = vmatprep.mubr.f32.mxu0 0.0
        %661 = vmatmul.mubr.f32.gmra.mxu0 %v594
        %v662 = vpop.f32.mrf.mxu0
        %v663 = vadd.f32 %v589, %v662
        %v664 = vpop.f32.mrf.mxu0
        %v665 = vadd.f32 %v591, %v664
        %666 = vdwg.mxu0
        %667 = vrot.lane.b32.xlu0 %v450, 15
        %v668 = vpop.permute.xlu0 %667
        %669 = vrot.lane.b32.xlu0 %v452, 15
        %v670 = vpop.permute.xlu0 %669
        %671 = vrot.lane.b32.xlu0 %v451, 15
        %v672 = vpop.permute.xlu0 %671
        %673 = vrot.lane.b32.xlu0 %v453, 15
        %v674 = vpop.permute.xlu0 %673
        %vm675 = vcmp.lt.s32.totalorder %v463, 15
        %v676 = vsel %vm675, %v668, %v672
        %v677 = vsel %vm675, %v670, %v674
        %v678 = vsel %vm675, %v672, %v668
        %v679 = vsel %vm675, %v674, %v670
        %s680 = scalar_lea.vmem [#allocation5], 2
        %v681 = vld [vmem:[%s680] ss:$8 sm:$0x3]
        %v683 = vlaneseq
        %v684 = vshrl.u32 %v683, 7
        %v685 = vsub.s32 0, %v684
        %v686 = vrot.slane %v681, %v685
        %v687 = vlaneseq
        %v688 = vshrl.u32 %v687, 7
        %v689 = vsub.s32 1, %v688
        %v690 = vrot.slane %v681, %v689
        %v693 = vmul.f32 %v678, %v686
        %v694 = vmul.f32 %v676, %v690
        %v695 = vmul.f32 %v679, %v686
        %v696 = vmul.f32 %v677, %v690
        %s697 = scalar_lea.vmem %s5, 8
        %v698 = vld [vmem:[%s697] sm:$0xf]
        %v700 = vsel %vm518, %v698, 0
        %702 = vmatprep.subr.mxu0 0.0
        %703 = vmatpush1.msra.mxu0 0.0
        %704 = vmatprep.subr.mxu0 0.0
        %705 = vmatpush1.msra.mxu0 0.0
        %706 = vmatprep.subr.mxu0 0.0
        %707 = vmatpush1.msra.mxu0 0.0
        %708 = vmatprep.subr.mxu0 0.0
        %709 = vmatpush1.msra.mxu0 0.0
        %710 = vmatprep.subr.mxu0 0.0
        %711 = vmatpush1.msra.mxu0 0.0
        %712 = vmatprep.subr.mxu0 0.0
        %713 = vmatpush1.msra.mxu0 0.0
        %714 = vmatprep.subr.mxu0 0.0
        %715 = vmatpush1.msra.mxu0 0.0
        %716 = vmatprep.subr.mxu0 0.0
        %717 = vmatpush1.msra.mxu0 0.0
        %718 = vmatprep.subr.mxu0 0.0
        %719 = vmatpush1.msra.mxu0 0.0
        %720 = vmatprep.subr.mxu0 0.0
        %721 = vmatpush1.msra.mxu0 0.0
        %722 = vmatprep.subr.mxu0 0.0
        %723 = vmatpush1.msra.mxu0 0.0
        %724 = vmatprep.subr.mxu0 0.0
        %725 = vmatpush1.msra.mxu0 0.0
        %726 = vmatprep.subr.mxu0 0.0
        %727 = vmatpush1.msra.mxu0 0.0
        %728 = vmatprep.subr.mxu0 0.0
        %729 = vmatpush1.msra.mxu0 0.0
        %730 = vmatprep.subr.mxu0 %v696
        %731 = vmatpush1.msra.mxu0 %v695
        %732 = vmatprep.subr.mxu0 %v694
        %733 = vmatpush1.msra.mxu0 %v693
        %734 = vmatprep.subr.mxu0 0.0
        %735 = vmatpush2.msra.mxu0 0.0
        %736 = vmatprep.subr.mxu0 0.0
        %737 = vmatpush2.msra.mxu0 0.0
        %738 = vmatprep.subr.mxu0 0.0
        %739 = vmatpush2.msra.mxu0 0.0
        %740 = vmatprep.subr.mxu0 0.0
        %741 = vmatpush2.msra.mxu0 0.0
        %742 = vmatprep.subr.mxu0 0.0
        %743 = vmatpush2.msra.mxu0 0.0
        %744 = vmatprep.subr.mxu0 0.0
        %745 = vmatpush2.msra.mxu0 0.0
        %746 = vmatprep.subr.mxu0 0.0
        %747 = vmatpush2.msra.mxu0 0.0
        %748 = vmatprep.subr.mxu0 0.0
        %749 = vmatpush2.msra.mxu0 0.0
        %750 = vmatprep.subr.mxu0 0.0
        %751 = vmatpush2.msra.mxu0 0.0
        %752 = vmatprep.subr.mxu0 0.0
        %753 = vmatpush2.msra.mxu0 0.0
        %754 = vmatprep.subr.mxu0 0.0
        %755 = vmatpush2.msra.mxu0 0.0
        %756 = vmatprep.subr.mxu0 0.0
        %757 = vmatpush2.msra.mxu0 0.0
        %758 = vmatprep.subr.mxu0 0.0
        %759 = vmatpush2.msra.mxu0 0.0
        %760 = vmatprep.subr.mxu0 0.0
        %761 = vmatpush2.msra.mxu0 0.0
        %762 = vmatprep.subr.mxu0 0.0
        %763 = vmatpush2.msra.mxu0 0.0
        %764 = vmatprep.subr.mxu0 0.0
        %765 = vmatpush2.msra.mxu0 0.0
        %766 = vmatprep.mubr.f32.mxu0 0.0
        %767 = vmatmul.mubr.f32.gmra.mxu0 %v700
        %v768 = vpop.f32.mrf.mxu0
        %v769 = vadd.f32 0.0, %v768
        %v770 = vpop.f32.mrf.mxu0
        %v771 = vadd.f32 0.0, %v770
        %772 = vdwg.mxu0
        %v773 = vadd.f32 %v663, %v769
        %v774 = vadd.f32 %v665, %v771
        %775 = vrot.lane.b32.xlu0 %v450, 1
        %v776 = vpop.permute.xlu0 %775
        %777 = vrot.lane.b32.xlu0 %v452, 1
        %v778 = vpop.permute.xlu0 %777
        %779 = vrot.lane.b32.xlu0 %v451, 1
        %v780 = vpop.permute.xlu0 %779
        %781 = vrot.lane.b32.xlu0 %v453, 1
        %v782 = vpop.permute.xlu0 %781
        %vm783 = vcmp.lt.s32.totalorder %v463, 1
        %v784 = vsel %vm783, %v776, %v780
        %v785 = vsel %vm783, %v778, %v782
        %v786 = vsel %vm783, %v780, %v776
        %v787 = vsel %vm783, %v782, %v778
        %s788 = scalar_lea.vmem [#allocation5], 3
        %v789 = vld [vmem:[%s788] ss:$8 sm:$0x3]
        %v791 = vlaneseq
        %v792 = vshrl.u32 %v791, 7
        %v793 = vsub.s32 0, %v792
        %v794 = vrot.slane %v789, %v793
        %v795 = vlaneseq
        %v796 = vshrl.u32 %v795, 7
        %v797 = vsub.s32 1, %v796
        %v798 = vrot.slane %v789, %v797
        %v801 = vmul.f32 %v786, %v794
        %v802 = vmul.f32 %v784, %v798
        %v803 = vmul.f32 %v787, %v794
        %v804 = vmul.f32 %v785, %v798
        %s805 = scalar_lea.vmem %s5, 12
        %v806 = vld [vmem:[%s805] sm:$0xf]
        %v808 = vsel %vm518, %v806, 0
        %810 = vmatprep.subr.mxu0 0.0
        %811 = vmatpush1.msra.mxu0 0.0
        %812 = vmatprep.subr.mxu0 0.0
        %813 = vmatpush1.msra.mxu0 0.0
        %814 = vmatprep.subr.mxu0 0.0
        %815 = vmatpush1.msra.mxu0 0.0
        %816 = vmatprep.subr.mxu0 0.0
        %817 = vmatpush1.msra.mxu0 0.0
        %818 = vmatprep.subr.mxu0 0.0
        %819 = vmatpush1.msra.mxu0 0.0
        %820 = vmatprep.subr.mxu0 0.0
        %821 = vmatpush1.msra.mxu0 0.0
        %822 = vmatprep.subr.mxu0 0.0
        %823 = vmatpush1.msra.mxu0 0.0
        %824 = vmatprep.subr.mxu0 0.0
        %825 = vmatpush1.msra.mxu0 0.0
        %826 = vmatprep.subr.mxu0 0.0
        %827 = vmatpush1.msra.mxu0 0.0
        %828 = vmatprep.subr.mxu0 0.0
        %829 = vmatpush1.msra.mxu0 0.0
        %830 = vmatprep.subr.mxu0 0.0
        %831 = vmatpush1.msra.mxu0 0.0
        %832 = vmatprep.subr.mxu0 0.0
        %833 = vmatpush1.msra.mxu0 0.0
        %834 = vmatprep.subr.mxu0 0.0
        %835 = vmatpush1.msra.mxu0 0.0
        %836 = vmatprep.subr.mxu0 0.0
        %837 = vmatpush1.msra.mxu0 0.0
        %838 = vmatprep.subr.mxu0 %v804
        %839 = vmatpush1.msra.mxu0 %v803
        %840 = vmatprep.subr.mxu0 %v802
        %841 = vmatpush1.msra.mxu0 %v801
        %842 = vmatprep.subr.mxu0 0.0
        %843 = vmatpush2.msra.mxu0 0.0
        %844 = vmatprep.subr.mxu0 0.0
        %845 = vmatpush2.msra.mxu0 0.0
        %846 = vmatprep.subr.mxu0 0.0
        %847 = vmatpush2.msra.mxu0 0.0
        %848 = vmatprep.subr.mxu0 0.0
        %849 = vmatpush2.msra.mxu0 0.0
        %850 = vmatprep.subr.mxu0 0.0
        %851 = vmatpush2.msra.mxu0 0.0
        %852 = vmatprep.subr.mxu0 0.0
        %853 = vmatpush2.msra.mxu0 0.0
        %854 = vmatprep.subr.mxu0 0.0
        %855 = vmatpush2.msra.mxu0 0.0
        %856 = vmatprep.subr.mxu0 0.0
        %857 = vmatpush2.msra.mxu0 0.0
        %858 = vmatprep.subr.mxu0 0.0
        %859 = vmatpush2.msra.mxu0 0.0
        %860 = vmatprep.subr.mxu0 0.0
        %861 = vmatpush2.msra.mxu0 0.0
        %862 = vmatprep.subr.mxu0 0.0
        %863 = vmatpush2.msra.mxu0 0.0
        %864 = vmatprep.subr.mxu0 0.0
        %865 = vmatpush2.msra.mxu0 0.0
        %866 = vmatprep.subr.mxu0 0.0
        %867 = vmatpush2.msra.mxu0 0.0
        %868 = vmatprep.subr.mxu0 0.0
        %869 = vmatpush2.msra.mxu0 0.0
        %870 = vmatprep.subr.mxu0 0.0
        %871 = vmatpush2.msra.mxu0 0.0
        %872 = vmatprep.subr.mxu0 0.0
        %873 = vmatpush2.msra.mxu0 0.0
        %874 = vmatprep.mubr.f32.mxu0 0.0
        %875 = vmatmul.mubr.f32.gmra.mxu0 %v808
        %v876 = vpop.f32.mrf.mxu0
        %v877 = vadd.f32 0.0, %v876
        %v878 = vpop.f32.mrf.mxu0
        %v879 = vadd.f32 0.0, %v878
        %880 = vdwg.mxu0
        %v881 = vadd.f32 %v773, %v877
        %v882 = vadd.f32 %v774, %v879
        %s883 = scalar_lea.vmem %s5, 16
        %v884 = vld [vmem:[%s883] sm:$0xf]
        %v886 = vsel %vm518, %v884, 0
        %888 = vmatprep.subr.mxu0 0.0
        %889 = vmatpush1.msra.mxu0 0.0
        %890 = vmatprep.subr.mxu0 0.0
        %891 = vmatpush1.msra.mxu0 0.0
        %892 = vmatprep.subr.mxu0 0.0
        %893 = vmatpush1.msra.mxu0 0.0
        %894 = vmatprep.subr.mxu0 0.0
        %895 = vmatpush1.msra.mxu0 0.0
        %896 = vmatprep.subr.mxu0 0.0
        %897 = vmatpush1.msra.mxu0 0.0
        %898 = vmatprep.subr.mxu0 0.0
        %899 = vmatpush1.msra.mxu0 0.0
        %900 = vmatprep.subr.mxu0 0.0
        %901 = vmatpush1.msra.mxu0 0.0
        %902 = vmatprep.subr.mxu0 0.0
        %903 = vmatpush1.msra.mxu0 0.0
        %904 = vmatprep.subr.mxu0 0.0
        %905 = vmatpush1.msra.mxu0 0.0
        %906 = vmatprep.subr.mxu0 0.0
        %907 = vmatpush1.msra.mxu0 0.0
        %908 = vmatprep.subr.mxu0 0.0
        %909 = vmatpush1.msra.mxu0 0.0
        %910 = vmatprep.subr.mxu0 0.0
        %911 = vmatpush1.msra.mxu0 0.0
        %912 = vmatprep.subr.mxu0 0.0
        %913 = vmatpush1.msra.mxu0 0.0
        %914 = vmatprep.subr.mxu0 0.0
        %915 = vmatpush1.msra.mxu0 0.0
        %916 = vmatprep.subr.mxu0 %v453
        %917 = vmatpush1.msra.mxu0 %v452
        %918 = vmatprep.subr.mxu0 %v451
        %919 = vmatpush1.msra.mxu0 %v450
        %920 = vmatprep.subr.mxu0 0.0
        %921 = vmatpush2.msra.mxu0 0.0
        %922 = vmatprep.subr.mxu0 0.0
        %923 = vmatpush2.msra.mxu0 0.0
        %924 = vmatprep.subr.mxu0 0.0
        %925 = vmatpush2.msra.mxu0 0.0
        %926 = vmatprep.subr.mxu0 0.0
        %927 = vmatpush2.msra.mxu0 0.0
        %928 = vmatprep.subr.mxu0 0.0
        %929 = vmatpush2.msra.mxu0 0.0
        %930 = vmatprep.subr.mxu0 0.0
        %931 = vmatpush2.msra.mxu0 0.0
        %932 = vmatprep.subr.mxu0 0.0
        %933 = vmatpush2.msra.mxu0 0.0
        %934 = vmatprep.subr.mxu0 0.0
        %935 = vmatpush2.msra.mxu0 0.0
        %936 = vmatprep.subr.mxu0 0.0
        %937 = vmatpush2.msra.mxu0 0.0
        %938 = vmatprep.subr.mxu0 0.0
        %939 = vmatpush2.msra.mxu0 0.0
        %940 = vmatprep.subr.mxu0 0.0
        %941 = vmatpush2.msra.mxu0 0.0
        %942 = vmatprep.subr.mxu0 0.0
        %943 = vmatpush2.msra.mxu0 0.0
        %944 = vmatprep.subr.mxu0 0.0
        %945 = vmatpush2.msra.mxu0 0.0
        %946 = vmatprep.subr.mxu0 0.0
        %947 = vmatpush2.msra.mxu0 0.0
        %948 = vmatprep.subr.mxu0 0.0
        %949 = vmatpush2.msra.mxu0 0.0
        %950 = vmatprep.subr.mxu0 0.0
        %951 = vmatpush2.msra.mxu0 0.0
        %952 = vmatprep.mubr.f32.mxu0 0.0
        %953 = vmatmul.mubr.f32.gmra.mxu0 %v886
        %v954 = vpop.f32.mrf.mxu0
        %v955 = vadd.f32 0.0, %v954
        %v956 = vpop.f32.mrf.mxu0
        %v957 = vadd.f32 0.0, %v956
        %958 = vdwg.mxu0
        %v959 = vadd.f32 %v881, %v955
        %v960 = vadd.f32 %v882, %v957
        %961 = vrot.lane.b32.xlu0 %v450, 127
        %v962 = vpop.permute.xlu0 %961
        %963 = vrot.lane.b32.xlu0 %v452, 127
        %v964 = vpop.permute.xlu0 %963
        %965 = vrot.lane.b32.xlu0 %v451, 127
        %v966 = vpop.permute.xlu0 %965
        %967 = vrot.lane.b32.xlu0 %v453, 127
        %v968 = vpop.permute.xlu0 %967
        %vm969 = vcmp.lt.s32.totalorder %v463, 127
        %v970 = vsel %vm969, %v962, %v966
        %v971 = vsel %vm969, %v964, %v968
        %v972 = vsel %vm969, %v966, %v962
        %v973 = vsel %vm969, %v968, %v964
        %s974 = scalar_lea.vmem [#allocation5], 5
        %v975 = vld [vmem:[%s974] ss:$8 sm:$0x3]
        %v977 = vlaneseq
        %v978 = vshrl.u32 %v977, 7
        %v979 = vsub.s32 0, %v978
        %v980 = vrot.slane %v975, %v979
        %v981 = vlaneseq
        %v982 = vshrl.u32 %v981, 7
        %v983 = vsub.s32 1, %v982
        %v984 = vrot.slane %v975, %v983
        %v987 = vmul.f32 %v970, %v980
        %v988 = vmul.f32 %v972, %v984
        %v989 = vmul.f32 %v971, %v980
        %v990 = vmul.f32 %v973, %v984
        %s991 = scalar_lea.vmem %s5, 20
        %v992 = vld [vmem:[%s991] sm:$0xf]
        %v994 = vsel %vm518, %v992, 0
        %996 = vmatprep.subr.mxu0 0.0
        %997 = vmatpush1.msra.mxu0 0.0
        %998 = vmatprep.subr.mxu0 0.0
        %999 = vmatpush1.msra.mxu0 0.0
        %1000 = vmatprep.subr.mxu0 0.0
        %1001 = vmatpush1.msra.mxu0 0.0
        %1002 = vmatprep.subr.mxu0 0.0
        %1003 = vmatpush1.msra.mxu0 0.0
        %1004 = vmatprep.subr.mxu0 0.0
        %1005 = vmatpush1.msra.mxu0 0.0
        %1006 = vmatprep.subr.mxu0 0.0
        %1007 = vmatpush1.msra.mxu0 0.0
        %1008 = vmatprep.subr.mxu0 0.0
        %1009 = vmatpush1.msra.mxu0 0.0
        %1010 = vmatprep.subr.mxu0 0.0
        %1011 = vmatpush1.msra.mxu0 0.0
        %1012 = vmatprep.subr.mxu0 0.0
        %1013 = vmatpush1.msra.mxu0 0.0
        %1014 = vmatprep.subr.mxu0 0.0
        %1015 = vmatpush1.msra.mxu0 0.0
        %1016 = vmatprep.subr.mxu0 0.0
        %1017 = vmatpush1.msra.mxu0 0.0
        %1018 = vmatprep.subr.mxu0 0.0
        %1019 = vmatpush1.msra.mxu0 0.0
        %1020 = vmatprep.subr.mxu0 0.0
        %1021 = vmatpush1.msra.mxu0 0.0
        %1022 = vmatprep.subr.mxu0 0.0
        %1023 = vmatpush1.msra.mxu0 0.0
        %1024 = vmatprep.subr.mxu0 %v990
        %1025 = vmatpush1.msra.mxu0 %v989
        %1026 = vmatprep.subr.mxu0 %v988
        %1027 = vmatpush1.msra.mxu0 %v987
        %1028 = vmatprep.subr.mxu0 0.0
        %1029 = vmatpush2.msra.mxu0 0.0
        %1030 = vmatprep.subr.mxu0 0.0
        %1031 = vmatpush2.msra.mxu0 0.0
        %1032 = vmatprep.subr.mxu0 0.0
        %1033 = vmatpush2.msra.mxu0 0.0
        %1034 = vmatprep.subr.mxu0 0.0
        %1035 = vmatpush2.msra.mxu0 0.0
        %1036 = vmatprep.subr.mxu0 0.0
        %1037 = vmatpush2.msra.mxu0 0.0
        %1038 = vmatprep.subr.mxu0 0.0
        %1039 = vmatpush2.msra.mxu0 0.0
        %1040 = vmatprep.subr.mxu0 0.0
        %1041 = vmatpush2.msra.mxu0 0.0
        %1042 = vmatprep.subr.mxu0 0.0
        %1043 = vmatpush2.msra.mxu0 0.0
        %1044 = vmatprep.subr.mxu0 0.0
        %1045 = vmatpush2.msra.mxu0 0.0
        %1046 = vmatprep.subr.mxu0 0.0
        %1047 = vmatpush2.msra.mxu0 0.0
        %1048 = vmatprep.subr.mxu0 0.0
        %1049 = vmatpush2.msra.mxu0 0.0
        %1050 = vmatprep.subr.mxu0 0.0
        %1051 = vmatpush2.msra.mxu0 0.0
        %1052 = vmatprep.subr.mxu0 0.0
        %1053 = vmatpush2.msra.mxu0 0.0
        %1054 = vmatprep.subr.mxu0 0.0
        %1055 = vmatpush2.msra.mxu0 0.0
        %1056 = vmatprep.subr.mxu0 0.0
        %1057 = vmatpush2.msra.mxu0 0.0
        %1058 = vmatprep.subr.mxu0 0.0
        %1059 = vmatpush2.msra.mxu0 0.0
        %1060 = vmatprep.mubr.f32.mxu0 0.0
        %1061 = vmatmul.mubr.f32.gmra.mxu0 %v994
        %v1062 = vpop.f32.mrf.mxu0
        %v1063 = vadd.f32 0.0, %v1062
        %v1064 = vpop.f32.mrf.mxu0
        %v1065 = vadd.f32 0.0, %v1064
        %1066 = vdwg.mxu0
        %v1067 = vadd.f32 %v959, %v1063
        %v1068 = vadd.f32 %v960, %v1065
        %1069 = vrot.lane.b32.xlu0 %v450, 113
        %v1070 = vpop.permute.xlu0 %1069
        %1071 = vrot.lane.b32.xlu0 %v452, 113
        %v1072 = vpop.permute.xlu0 %1071
        %1073 = vrot.lane.b32.xlu0 %v451, 113
        %v1074 = vpop.permute.xlu0 %1073
        %1075 = vrot.lane.b32.xlu0 %v453, 113
        %v1076 = vpop.permute.xlu0 %1075
        %vm1077 = vcmp.lt.s32.totalorder %v463, 113
        %v1078 = vsel %vm1077, %v1070, %v1074
        %v1079 = vsel %vm1077, %v1072, %v1076
        %v1080 = vsel %vm1077, %v1074, %v1070
        %v1081 = vsel %vm1077, %v1076, %v1072
        %s1082 = scalar_lea.vmem [#allocation5], 6
        %v1083 = vld [vmem:[%s1082] ss:$8 sm:$0x3]
        %v1085 = vlaneseq
        %v1086 = vshrl.u32 %v1085, 7
        %v1087 = vsub.s32 0, %v1086
        %v1088 = vrot.slane %v1083, %v1087
        %v1089 = vlaneseq
        %v1090 = vshrl.u32 %v1089, 7
        %v1091 = vsub.s32 1, %v1090
        %v1092 = vrot.slane %v1083, %v1091
        %v1095 = vmul.f32 %v1078, %v1088
        %v1096 = vmul.f32 %v1080, %v1092
        %v1097 = vmul.f32 %v1079, %v1088
        %v1098 = vmul.f32 %v1081, %v1092
        %s1099 = scalar_lea.vmem %s5, 24
        %v1100 = vld [vmem:[%s1099] sm:$0xf]
        %v1102 = vsel %vm518, %v1100, 0
        %1104 = vmatprep.subr.mxu0 0.0
        %1105 = vmatpush1.msra.mxu0 0.0
        %1106 = vmatprep.subr.mxu0 0.0
        %1107 = vmatpush1.msra.mxu0 0.0
        %1108 = vmatprep.subr.mxu0 0.0
        %1109 = vmatpush1.msra.mxu0 0.0
        %1110 = vmatprep.subr.mxu0 0.0
        %1111 = vmatpush1.msra.mxu0 0.0
        %1112 = vmatprep.subr.mxu0 0.0
        %1113 = vmatpush1.msra.mxu0 0.0
        %1114 = vmatprep.subr.mxu0 0.0
        %1115 = vmatpush1.msra.mxu0 0.0
        %1116 = vmatprep.subr.mxu0 0.0
        %1117 = vmatpush1.msra.mxu0 0.0
        %1118 = vmatprep.subr.mxu0 0.0
        %1119 = vmatpush1.msra.mxu0 0.0
        %1120 = vmatprep.subr.mxu0 0.0
        %1121 = vmatpush1.msra.mxu0 0.0
        %1122 = vmatprep.subr.mxu0 0.0
        %1123 = vmatpush1.msra.mxu0 0.0
        %1124 = vmatprep.subr.mxu0 0.0
        %1125 = vmatpush1.msra.mxu0 0.0
        %1126 = vmatprep.subr.mxu0 0.0
        %1127 = vmatpush1.msra.mxu0 0.0
        %1128 = vmatprep.subr.mxu0 0.0
        %1129 = vmatpush1.msra.mxu0 0.0
        %1130 = vmatprep.subr.mxu0 0.0
        %1131 = vmatpush1.msra.mxu0 0.0
        %1132 = vmatprep.subr.mxu0 %v1098
        %1133 = vmatpush1.msra.mxu0 %v1097
        %1134 = vmatprep.subr.mxu0 %v1096
        %1135 = vmatpush1.msra.mxu0 %v1095
        %1136 = vmatprep.subr.mxu0 0.0
        %1137 = vmatpush2.msra.mxu0 0.0
        %1138 = vmatprep.subr.mxu0 0.0
        %1139 = vmatpush2.msra.mxu0 0.0
        %1140 = vmatprep.subr.mxu0 0.0
        %1141 = vmatpush2.msra.mxu0 0.0
        %1142 = vmatprep.subr.mxu0 0.0
        %1143 = vmatpush2.msra.mxu0 0.0
        %1144 = vmatprep.subr.mxu0 0.0
        %1145 = vmatpush2.msra.mxu0 0.0
        %1146 = vmatprep.subr.mxu0 0.0
        %1147 = vmatpush2.msra.mxu0 0.0
        %1148 = vmatprep.subr.mxu0 0.0
        %1149 = vmatpush2.msra.mxu0 0.0
        %1150 = vmatprep.subr.mxu0 0.0
        %1151 = vmatpush2.msra.mxu0 0.0
        %1152 = vmatprep.subr.mxu0 0.0
        %1153 = vmatpush2.msra.mxu0 0.0
        %1154 = vmatprep.subr.mxu0 0.0
        %1155 = vmatpush2.msra.mxu0 0.0
        %1156 = vmatprep.subr.mxu0 0.0
        %1157 = vmatpush2.msra.mxu0 0.0
        %1158 = vmatprep.subr.mxu0 0.0
        %1159 = vmatpush2.msra.mxu0 0.0
        %1160 = vmatprep.subr.mxu0 0.0
        %1161 = vmatpush2.msra.mxu0 0.0
        %1162 = vmatprep.subr.mxu0 0.0
        %1163 = vmatpush2.msra.mxu0 0.0
        %1164 = vmatprep.subr.mxu0 0.0
        %1165 = vmatpush2.msra.mxu0 0.0
        %1166 = vmatprep.subr.mxu0 0.0
        %1167 = vmatpush2.msra.mxu0 0.0
        %1168 = vmatprep.mubr.f32.mxu0 0.0
        %1169 = vmatmul.mubr.f32.gmra.mxu0 %v1102
        %v1170 = vpop.f32.mrf.mxu0
        %v1171 = vadd.f32 0.0, %v1170
        %v1172 = vpop.f32.mrf.mxu0
        %v1173 = vadd.f32 0.0, %v1172
        %1174 = vdwg.mxu0
        %v1175 = vadd.f32 %v1067, %v1171
        %v1176 = vadd.f32 %v1068, %v1173
        %1177 = vrot.lane.b32.xlu0 %v450, 112
        %v1178 = vpop.permute.xlu0 %1177
        %1179 = vrot.lane.b32.xlu0 %v452, 112
        %v1180 = vpop.permute.xlu0 %1179
        %1181 = vrot.lane.b32.xlu0 %v451, 112
        %v1182 = vpop.permute.xlu0 %1181
        %1183 = vrot.lane.b32.xlu0 %v453, 112
        %v1184 = vpop.permute.xlu0 %1183
        %vm1185 = vcmp.lt.s32.totalorder %v463, 112
        %v1186 = vsel %vm1185, %v1178, %v1182
        %v1187 = vsel %vm1185, %v1180, %v1184
        %v1188 = vsel %vm1185, %v1182, %v1178
        %v1189 = vsel %vm1185, %v1184, %v1180
        %s1190 = scalar_lea.vmem [#allocation5], 7
        %v1191 = vld [vmem:[%s1190] ss:$8 sm:$0x3]
        %v1193 = vlaneseq
        %v1194 = vshrl.u32 %v1193, 7
        %v1195 = vsub.s32 0, %v1194
        %v1196 = vrot.slane %v1191, %v1195
        %v1197 = vlaneseq
        %v1198 = vshrl.u32 %v1197, 7
        %v1199 = vsub.s32 1, %v1198
        %v1200 = vrot.slane %v1191, %v1199
        %v1203 = vmul.f32 %v1186, %v1196
        %v1204 = vmul.f32 %v1188, %v1200
        %v1205 = vmul.f32 %v1187, %v1196
        %v1206 = vmul.f32 %v1189, %v1200
        %s1207 = scalar_lea.vmem %s5, 28
        %v1208 = vld [vmem:[%s1207] sm:$0xf]
        %v1210 = vsel %vm518, %v1208, 0
        %1212 = vmatprep.subr.mxu0 0.0
        %1213 = vmatpush1.msra.mxu0 0.0
        %1214 = vmatprep.subr.mxu0 0.0
        %1215 = vmatpush1.msra.mxu0 0.0
        %1216 = vmatprep.subr.mxu0 0.0
        %1217 = vmatpush1.msra.mxu0 0.0
        %1218 = vmatprep.subr.mxu0 0.0
        %1219 = vmatpush1.msra.mxu0 0.0
        %1220 = vmatprep.subr.mxu0 0.0
        %1221 = vmatpush1.msra.mxu0 0.0
        %1222 = vmatprep.subr.mxu0 0.0
        %1223 = vmatpush1.msra.mxu0 0.0
        %1224 = vmatprep.subr.mxu0 0.0
        %1225 = vmatpush1.msra.mxu0 0.0
        %1226 = vmatprep.subr.mxu0 0.0
        %1227 = vmatpush1.msra.mxu0 0.0
        %1228 = vmatprep.subr.mxu0 0.0
        %1229 = vmatpush1.msra.mxu0 0.0
        %1230 = vmatprep.subr.mxu0 0.0
        %1231 = vmatpush1.msra.mxu0 0.0
        %1232 = vmatprep.subr.mxu0 0.0
        %1233 = vmatpush1.msra.mxu0 0.0
        %1234 = vmatprep.subr.mxu0 0.0
        %1235 = vmatpush1.msra.mxu0 0.0
        %1236 = vmatprep.subr.mxu0 0.0
        %1237 = vmatpush1.msra.mxu0 0.0
        %1238 = vmatprep.subr.mxu0 0.0
        %1239 = vmatpush1.msra.mxu0 0.0
        %1240 = vmatprep.subr.mxu0 %v1206
        %1241 = vmatpush1.msra.mxu0 %v1205
        %1242 = vmatprep.subr.mxu0 %v1204
        %1243 = vmatpush1.msra.mxu0 %v1203
        %1244 = vmatprep.subr.mxu0 0.0
        %1245 = vmatpush2.msra.mxu0 0.0
        %1246 = vmatprep.subr.mxu0 0.0
        %1247 = vmatpush2.msra.mxu0 0.0
        %1248 = vmatprep.subr.mxu0 0.0
        %1249 = vmatpush2.msra.mxu0 0.0
        %1250 = vmatprep.subr.mxu0 0.0
        %1251 = vmatpush2.msra.mxu0 0.0
        %1252 = vmatprep.subr.mxu0 0.0
        %1253 = vmatpush2.msra.mxu0 0.0
        %1254 = vmatprep.subr.mxu0 0.0
        %1255 = vmatpush2.msra.mxu0 0.0
        %1256 = vmatprep.subr.mxu0 0.0
        %1257 = vmatpush2.msra.mxu0 0.0
        %1258 = vmatprep.subr.mxu0 0.0
        %1259 = vmatpush2.msra.mxu0 0.0
        %1260 = vmatprep.subr.mxu0 0.0
        %1261 = vmatpush2.msra.mxu0 0.0
        %1262 = vmatprep.subr.mxu0 0.0
        %1263 = vmatpush2.msra.mxu0 0.0
        %1264 = vmatprep.subr.mxu0 0.0
        %1265 = vmatpush2.msra.mxu0 0.0
        %1266 = vmatprep.subr.mxu0 0.0
        %1267 = vmatpush2.msra.mxu0 0.0
        %1268 = vmatprep.subr.mxu0 0.0
        %1269 = vmatpush2.msra.mxu0 0.0
        %1270 = vmatprep.subr.mxu0 0.0
        %1271 = vmatpush2.msra.mxu0 0.0
        %1272 = vmatprep.subr.mxu0 0.0
        %1273 = vmatpush2.msra.mxu0 0.0
        %1274 = vmatprep.subr.mxu0 0.0
        %1275 = vmatpush2.msra.mxu0 0.0
        %1276 = vmatprep.mubr.f32.mxu0 0.0
        %1277 = vmatmul.mubr.f32.gmra.mxu0 %v1210
        %v1278 = vpop.f32.mrf.mxu0
        %v1279 = vadd.f32 0.0, %v1278
        %v1280 = vpop.f32.mrf.mxu0
        %v1281 = vadd.f32 0.0, %v1280
        %1282 = vdwg.mxu0
        %v1283 = vadd.f32 %v1175, %v1279
        %v1284 = vadd.f32 %v1176, %v1281
        %1285 = vrot.lane.b32.xlu0 %v450, 111
        %v1286 = vpop.permute.xlu0 %1285
        %1287 = vrot.lane.b32.xlu0 %v452, 111
        %v1288 = vpop.permute.xlu0 %1287
        %1289 = vrot.lane.b32.xlu0 %v451, 111
        %v1290 = vpop.permute.xlu0 %1289
        %1291 = vrot.lane.b32.xlu0 %v453, 111
        %v1292 = vpop.permute.xlu0 %1291
        %vm1293 = vcmp.lt.s32.totalorder %v463, 111
        %v1294 = vsel %vm1293, %v1286, %v1290
        %v1295 = vsel %vm1293, %v1288, %v1292
        %v1296 = vsel %vm1293, %v1290, %v1286
        %v1297 = vsel %vm1293, %v1292, %v1288
        %s1298 = scalar_lea.vmem [#allocation5], 16
        %v1299 = vld [vmem:[%s1298] ss:$8 sm:$0x3]
        %v1301 = vlaneseq
        %v1302 = vshrl.u32 %v1301, 7
        %v1303 = vsub.s32 0, %v1302
        %v1304 = vrot.slane %v1299, %v1303
        %v1305 = vlaneseq
        %v1306 = vshrl.u32 %v1305, 7
        %v1307 = vsub.s32 1, %v1306
        %v1308 = vrot.slane %v1299, %v1307
        %v1311 = vmul.f32 %v1294, %v1304
        %v1312 = vmul.f32 %v1296, %v1308
        %v1313 = vmul.f32 %v1295, %v1304
        %v1314 = vmul.f32 %v1297, %v1308
        %s1315 = scalar_lea.vmem %s5, 32
        %v1316 = vld [vmem:[%s1315] sm:$0xf]
        %v1318 = vsel %vm518, %v1316, 0
        %1320 = vmatprep.subr.mxu0 0.0
        %1321 = vmatpush1.msra.mxu0 0.0
        %1322 = vmatprep.subr.mxu0 0.0
        %1323 = vmatpush1.msra.mxu0 0.0
        %1324 = vmatprep.subr.mxu0 0.0
        %1325 = vmatpush1.msra.mxu0 0.0
        %1326 = vmatprep.subr.mxu0 0.0
        %1327 = vmatpush1.msra.mxu0 0.0
        %1328 = vmatprep.subr.mxu0 0.0
        %1329 = vmatpush1.msra.mxu0 0.0
        %1330 = vmatprep.subr.mxu0 0.0
        %1331 = vmatpush1.msra.mxu0 0.0
        %1332 = vmatprep.subr.mxu0 0.0
        %1333 = vmatpush1.msra.mxu0 0.0
        %1334 = vmatprep.subr.mxu0 0.0
        %1335 = vmatpush1.msra.mxu0 0.0
        %1336 = vmatprep.subr.mxu0 0.0
        %1337 = vmatpush1.msra.mxu0 0.0
        %1338 = vmatprep.subr.mxu0 0.0
        %1339 = vmatpush1.msra.mxu0 0.0
        %1340 = vmatprep.subr.mxu0 0.0
        %1341 = vmatpush1.msra.mxu0 0.0
        %1342 = vmatprep.subr.mxu0 0.0
        %1343 = vmatpush1.msra.mxu0 0.0
        %1344 = vmatprep.subr.mxu0 0.0
        %1345 = vmatpush1.msra.mxu0 0.0
        %1346 = vmatprep.subr.mxu0 0.0
        %1347 = vmatpush1.msra.mxu0 0.0
        %1348 = vmatprep.subr.mxu0 %v1314
        %1349 = vmatpush1.msra.mxu0 %v1313
        %1350 = vmatprep.subr.mxu0 %v1312
        %1351 = vmatpush1.msra.mxu0 %v1311
        %1352 = vmatprep.subr.mxu0 0.0
        %1353 = vmatpush2.msra.mxu0 0.0
        %1354 = vmatprep.subr.mxu0 0.0
        %1355 = vmatpush2.msra.mxu0 0.0
        %1356 = vmatprep.subr.mxu0 0.0
        %1357 = vmatpush2.msra.mxu0 0.0
        %1358 = vmatprep.subr.mxu0 0.0
        %1359 = vmatpush2.msra.mxu0 0.0
        %1360 = vmatprep.subr.mxu0 0.0
        %1361 = vmatpush2.msra.mxu0 0.0
        %1362 = vmatprep.subr.mxu0 0.0
        %1363 = vmatpush2.msra.mxu0 0.0
        %1364 = vmatprep.subr.mxu0 0.0
        %1365 = vmatpush2.msra.mxu0 0.0
        %1366 = vmatprep.subr.mxu0 0.0
        %1367 = vmatpush2.msra.mxu0 0.0
        %1368 = vmatprep.subr.mxu0 0.0
        %1369 = vmatpush2.msra.mxu0 0.0
        %1370 = vmatprep.subr.mxu0 0.0
        %1371 = vmatpush2.msra.mxu0 0.0
        %1372 = vmatprep.subr.mxu0 0.0
        %1373 = vmatpush2.msra.mxu0 0.0
        %1374 = vmatprep.subr.mxu0 0.0
        %1375 = vmatpush2.msra.mxu0 0.0
        %1376 = vmatprep.subr.mxu0 0.0
        %1377 = vmatpush2.msra.mxu0 0.0
        %1378 = vmatprep.subr.mxu0 0.0
        %1379 = vmatpush2.msra.mxu0 0.0
        %1380 = vmatprep.subr.mxu0 0.0
        %1381 = vmatpush2.msra.mxu0 0.0
        %1382 = vmatprep.subr.mxu0 0.0
        %1383 = vmatpush2.msra.mxu0 0.0
        %1384 = vmatprep.mubr.f32.mxu0 0.0
        %1385 = vmatmul.mubr.f32.gmra.mxu0 %v1318
        %v1386 = vpop.f32.mrf.mxu0
        %v1387 = vadd.f32 0.0, %v1386
        %v1388 = vpop.f32.mrf.mxu0
        %v1389 = vadd.f32 0.0, %v1388
        %1390 = vdwg.mxu0
        %v1391 = vadd.f32 %v1283, %v1387
        %v1392 = vadd.f32 %v1284, %v1389
        %v1394 = vcombine.high %v321, %v321
        %v1398 = vrot.slane %v1391, 4
        %v1399 = vrot.slane %v1392, 4
        %v1402 = vsel %vm368, %v321, %v1398
        %v1403 = vsel %vm368, %v1394, %v1399
        %1404 = vst [vmem:[%s312] sm:$0xff] %v1402
        %1405 = vst [vmem:[%s312 + $0x8] sm:$0xff] %v1403
        %s1406 = scalar_lea.vmem %s278, 8 [#allocation2]
        %v1407 = vld [vmem:[%s1406] sm:$0xff]
        %v1408 = vmul.f32 %v1407, %v332
        %v1409 = vadd.f32 %v1408, %v345
        %v1410 = vmax.f32 %v1409, 0.0
        %v1412 = vcombine.high %v1410, %v1410
        %v1413 = vsel %vm368, %v1410, 0
        %v1415 = vsel %vm368, %v1412, 0
        %1417 = vmatprep.subr.mxu0 0.0
        %1418 = vmatpush1.msra.mxu0 0.0
        %1419 = vmatprep.subr.mxu0 0.0
        %1420 = vmatpush1.msra.mxu0 0.0
        %1421 = vmatprep.subr.mxu0 0.0
        %1422 = vmatpush1.msra.mxu0 0.0
        %1423 = vmatprep.subr.mxu0 0.0
        %1424 = vmatpush1.msra.mxu0 0.0
        %1425 = vmatprep.subr.mxu0 0.0
        %1426 = vmatpush1.msra.mxu0 0.0
        %1427 = vmatprep.subr.mxu0 0.0
        %1428 = vmatpush1.msra.mxu0 0.0
        %1429 = vmatprep.subr.mxu0 0.0
        %1430 = vmatpush1.msra.mxu0 0.0
        %1431 = vmatprep.subr.mxu0 0.0
        %1432 = vmatpush1.msra.mxu0 0.0
        %1433 = vmatprep.subr.mxu0 0.0
        %1434 = vmatpush1.msra.mxu0 0.0
        %1435 = vmatprep.subr.mxu0 0.0
        %1436 = vmatpush1.msra.mxu0 0.0
        %1437 = vmatprep.subr.mxu0 0.0
        %1438 = vmatpush1.msra.mxu0 0.0
        %1439 = vmatprep.subr.mxu0 0.0
        %1440 = vmatpush1.msra.mxu0 0.0
        %1441 = vmatprep.subr.mxu0 0.0
        %1442 = vmatpush1.msra.mxu0 0.0
        %1443 = vmatprep.subr.mxu0 0.0
        %1444 = vmatpush1.msra.mxu0 0.0
        %1445 = vmatprep.subr.mxu0 0.0
        %1446 = vmatpush1.msra.mxu0 0.0
        %1447 = vmatprep.subr.mxu0 %v1415
        %1448 = vmatpush1.msra.mxu0 %v1413
        %1449 = vmatprep.subr.mxu0 0.0
        %1450 = vmatpush2.msra.mxu0 0.0
        %1451 = vmatprep.subr.mxu0 0.0
        %1452 = vmatpush2.msra.mxu0 0.0
        %1453 = vmatprep.subr.mxu0 0.0
        %1454 = vmatpush2.msra.mxu0 0.0
        %1455 = vmatprep.subr.mxu0 0.0
        %1456 = vmatpush2.msra.mxu0 0.0
        %1457 = vmatprep.subr.mxu0 0.0
        %1458 = vmatpush2.msra.mxu0 0.0
        %1459 = vmatprep.subr.mxu0 0.0
        %1460 = vmatpush2.msra.mxu0 0.0
        %1461 = vmatprep.subr.mxu0 0.0
        %1462 = vmatpush2.msra.mxu0 0.0
        %1463 = vmatprep.subr.mxu0 0.0
        %1464 = vmatpush2.msra.mxu0 0.0
        %1465 = vmatprep.subr.mxu0 0.0
        %1466 = vmatpush2.msra.mxu0 0.0
        %1467 = vmatprep.subr.mxu0 0.0
        %1468 = vmatpush2.msra.mxu0 0.0
        %1469 = vmatprep.subr.mxu0 0.0
        %1470 = vmatpush2.msra.mxu0 0.0
        %1471 = vmatprep.subr.mxu0 0.0
        %1472 = vmatpush2.msra.mxu0 0.0
        %1473 = vmatprep.subr.mxu0 0.0
        %1474 = vmatpush2.msra.mxu0 0.0
        %1475 = vmatprep.subr.mxu0 0.0
        %1476 = vmatpush2.msra.mxu0 0.0
        %1477 = vmatprep.subr.mxu0 0.0
        %1478 = vmatpush2.msra.mxu0 0.0
        %1479 = vmatprep.subr.mxu0 0.0
        %1480 = vmatpush2.msra.mxu0 0.0
        %1481 = vmatprep.mubr.f32.mxu0 0.0
        %1482 = vmatmul.mubr.f32.gmra.mxu0 %v363
        %v1483 = vpop.f32.mrf.mxu0
        %v1484 = vadd.f32 %v352, %v1483
        %v1485 = vpop.f32.mrf.mxu0
        %v1486 = vadd.f32 %v352, %v1485
        %1487 = vmatprep.mubr.f32.mxu0 0.0
        %1488 = vmatmul.mubr.f32.gmra.mxu0 %v366
        %v1489 = vpop.f32.mrf.mxu0
        %v1490 = vadd.f32 %v357, %v1489
        %v1491 = vpop.f32.mrf.mxu0
        %v1492 = vadd.f32 %v357, %v1491
        %1493 = vdwg.mxu0
        %v1494 = vmax.f32 %v1484, 0.0
        %v1495 = vmax.f32 %v1486, 0.0
        %v1496 = vmax.f32 %v1490, 0.0
        %v1497 = vmax.f32 %v1492, 0.0
        %1498 = vrot.lane.b32.xlu0 %v1494, 17
        %v1499 = vpop.permute.xlu0 %1498
        %1500 = vrot.lane.b32.xlu0 %v1496, 17
        %v1501 = vpop.permute.xlu0 %1500
        %1502 = vrot.lane.b32.xlu0 %v1495, 17
        %v1503 = vpop.permute.xlu0 %1502
        %1504 = vrot.lane.b32.xlu0 %v1497, 17
        %v1505 = vpop.permute.xlu0 %1504
        %v1506 = vsel %vm464, %v1499, %v1503
        %v1507 = vsel %vm464, %v1501, %v1505
        %v1508 = vsel %vm464, %v1503, %v1499
        %v1509 = vsel %vm464, %v1505, %v1501
        %v1510 = vld [vmem:[#allocation5] ss:$8 sm:$0x3]
        %v1512 = vlaneseq
        %v1513 = vshrl.u32 %v1512, 7
        %v1514 = vsub.s32 0, %v1513
        %v1515 = vrot.slane %v1510, %v1514
        %v1516 = vlaneseq
        %v1517 = vshrl.u32 %v1516, 7
        %v1518 = vsub.s32 1, %v1517
        %v1519 = vrot.slane %v1510, %v1518
        %v1522 = vmul.f32 %v1508, %v1515
        %v1523 = vmul.f32 %v1506, %v1519
        %v1524 = vmul.f32 %v1509, %v1515
        %v1525 = vmul.f32 %v1507, %v1519
        %v1526 = vld [vmem:[%s5] sm:$0xf]
        %1527 = vrot.lane.b32.xlu0 %v1494, 16
        %v1528 = vpop.permute.xlu0 %1527
        %1529 = vrot.lane.b32.xlu0 %v1496, 16
        %v1530 = vpop.permute.xlu0 %1529
        %1531 = vrot.lane.b32.xlu0 %v1495, 16
        %v1532 = vpop.permute.xlu0 %1531
        %1533 = vrot.lane.b32.xlu0 %v1497, 16
        %v1534 = vpop.permute.xlu0 %1533
        %v1535 = vsel %vm494, %v1528, %v1532
        %v1536 = vsel %vm494, %v1530, %v1534
        %v1537 = vsel %vm494, %v1532, %v1528
        %v1538 = vsel %vm494, %v1534, %v1530
        %v1539 = vld [vmem:[%s499] ss:$8 sm:$0x3]
        %v1541 = vlaneseq
        %v1542 = vshrl.u32 %v1541, 7
        %v1543 = vsub.s32 0, %v1542
        %v1544 = vrot.slane %v1539, %v1543
        %v1545 = vlaneseq
        %v1546 = vshrl.u32 %v1545, 7
        %v1547 = vsub.s32 1, %v1546
        %v1548 = vrot.slane %v1539, %v1547
        %v1551 = vmul.f32 %v1537, %v1544
        %v1552 = vmul.f32 %v1535, %v1548
        %v1553 = vmul.f32 %v1538, %v1544
        %v1554 = vmul.f32 %v1536, %v1548
        %v1555 = vld [vmem:[%s516] sm:$0xf]
        %v1557 = vsel %vm518, %v1555, 0
        %1559 = vmatprep.subr.mxu0 0.0
        %1560 = vmatpush1.msra.mxu0 0.0
        %1561 = vmatprep.subr.mxu0 0.0
        %1562 = vmatpush1.msra.mxu0 0.0
        %1563 = vmatprep.subr.mxu0 0.0
        %1564 = vmatpush1.msra.mxu0 0.0
        %1565 = vmatprep.subr.mxu0 0.0
        %1566 = vmatpush1.msra.mxu0 0.0
        %1567 = vmatprep.subr.mxu0 0.0
        %1568 = vmatpush1.msra.mxu0 0.0
        %1569 = vmatprep.subr.mxu0 0.0
        %1570 = vmatpush1.msra.mxu0 0.0
        %1571 = vmatprep.subr.mxu0 0.0
        %1572 = vmatpush1.msra.mxu0 0.0
        %1573 = vmatprep.subr.mxu0 0.0
        %1574 = vmatpush1.msra.mxu0 0.0
        %1575 = vmatprep.subr.mxu0 0.0
        %1576 = vmatpush1.msra.mxu0 0.0
        %1577 = vmatprep.subr.mxu0 0.0
        %1578 = vmatpush1.msra.mxu0 0.0
        %1579 = vmatprep.subr.mxu0 0.0
        %1580 = vmatpush1.msra.mxu0 0.0
        %1581 = vmatprep.subr.mxu0 0.0
        %1582 = vmatpush1.msra.mxu0 0.0
        %1583 = vmatprep.subr.mxu0 0.0
        %1584 = vmatpush1.msra.mxu0 0.0
        %1585 = vmatprep.subr.mxu0 0.0
        %1586 = vmatpush1.msra.mxu0 0.0
        %1587 = vmatprep.subr.mxu0 %v1554
        %1588 = vmatpush1.msra.mxu0 %v1553
        %1589 = vmatprep.subr.mxu0 %v1552
        %1590 = vmatpush1.msra.mxu0 %v1551
        %1591 = vmatprep.subr.mxu0 0.0
        %1592 = vmatpush2.msra.mxu0 0.0
        %1593 = vmatprep.subr.mxu0 0.0
        %1594 = vmatpush2.msra.mxu0 0.0
        %1595 = vmatprep.subr.mxu0 0.0
        %1596 = vmatpush2.msra.mxu0 0.0
        %1597 = vmatprep.subr.mxu0 0.0
        %1598 = vmatpush2.msra.mxu0 0.0
        %1599 = vmatprep.subr.mxu0 0.0
        %1600 = vmatpush2.msra.mxu0 0.0
        %1601 = vmatprep.subr.mxu0 0.0
        %1602 = vmatpush2.msra.mxu0 0.0
        %1603 = vmatprep.subr.mxu0 0.0
        %1604 = vmatpush2.msra.mxu0 0.0
        %1605 = vmatprep.subr.mxu0 0.0
        %1606 = vmatpush2.msra.mxu0 0.0
        %1607 = vmatprep.subr.mxu0 0.0
        %1608 = vmatpush2.msra.mxu0 0.0
        %1609 = vmatprep.subr.mxu0 0.0
        %1610 = vmatpush2.msra.mxu0 0.0
        %1611 = vmatprep.subr.mxu0 0.0
        %1612 = vmatpush2.msra.mxu0 0.0
        %1613 = vmatprep.subr.mxu0 0.0
        %1614 = vmatpush2.msra.mxu0 0.0
        %1615 = vmatprep.subr.mxu0 0.0
        %1616 = vmatpush2.msra.mxu0 0.0
        %1617 = vmatprep.subr.mxu0 0.0
        %1618 = vmatpush2.msra.mxu0 0.0
        %1619 = vmatprep.subr.mxu0 0.0
        %1620 = vmatpush2.msra.mxu0 0.0
        %1621 = vmatprep.subr.mxu0 0.0
        %1622 = vmatpush2.msra.mxu0 0.0
        %1623 = vmatprep.mubr.f32.mxu0 0.0
        %1624 = vmatmul.mubr.f32.gmra.mxu0 %v1557
        %v1625 = vpop.f32.mrf.mxu0
        %v1626 = vadd.f32 0.0, %v1625
        %v1627 = vpop.f32.mrf.mxu0
        %v1628 = vadd.f32 0.0, %v1627
        %1629 = vdwg.mxu0
        %v1631 = vsel %vm518, %v1526, 0
        %1633 = vmatprep.subr.mxu0 0.0
        %1634 = vmatpush1.msra.mxu0 0.0
        %1635 = vmatprep.subr.mxu0 0.0
        %1636 = vmatpush1.msra.mxu0 0.0
        %1637 = vmatprep.subr.mxu0 0.0
        %1638 = vmatpush1.msra.mxu0 0.0
        %1639 = vmatprep.subr.mxu0 0.0
        %1640 = vmatpush1.msra.mxu0 0.0
        %1641 = vmatprep.subr.mxu0 0.0
        %1642 = vmatpush1.msra.mxu0 0.0
        %1643 = vmatprep.subr.mxu0 0.0
        %1644 = vmatpush1.msra.mxu0 0.0
        %1645 = vmatprep.subr.mxu0 0.0
        %1646 = vmatpush1.msra.mxu0 0.0
        %1647 = vmatprep.subr.mxu0 0.0
        %1648 = vmatpush1.msra.mxu0 0.0
        %1649 = vmatprep.subr.mxu0 0.0
        %1650 = vmatpush1.msra.mxu0 0.0
        %1651 = vmatprep.subr.mxu0 0.0
        %1652 = vmatpush1.msra.mxu0 0.0
        %1653 = vmatprep.subr.mxu0 0.0
        %1654 = vmatpush1.msra.mxu0 0.0
        %1655 = vmatprep.subr.mxu0 0.0
        %1656 = vmatpush1.msra.mxu0 0.0
        %1657 = vmatprep.subr.mxu0 0.0
        %1658 = vmatpush1.msra.mxu0 0.0
        %1659 = vmatprep.subr.mxu0 0.0
        %1660 = vmatpush1.msra.mxu0 0.0
        %1661 = vmatprep.subr.mxu0 %v1525
        %1662 = vmatpush1.msra.mxu0 %v1524
        %1663 = vmatprep.subr.mxu0 %v1523
        %1664 = vmatpush1.msra.mxu0 %v1522
        %1665 = vmatprep.subr.mxu0 0.0
        %1666 = vmatpush2.msra.mxu0 0.0
        %1667 = vmatprep.subr.mxu0 0.0
        %1668 = vmatpush2.msra.mxu0 0.0
        %1669 = vmatprep.subr.mxu0 0.0
        %1670 = vmatpush2.msra.mxu0 0.0
        %1671 = vmatprep.subr.mxu0 0.0
        %1672 = vmatpush2.msra.mxu0 0.0
        %1673 = vmatprep.subr.mxu0 0.0
        %1674 = vmatpush2.msra.mxu0 0.0
        %1675 = vmatprep.subr.mxu0 0.0
        %1676 = vmatpush2.msra.mxu0 0.0
        %1677 = vmatprep.subr.mxu0 0.0
        %1678 = vmatpush2.msra.mxu0 0.0
        %1679 = vmatprep.subr.mxu0 0.0
        %1680 = vmatpush2.msra.mxu0 0.0
        %1681 = vmatprep.subr.mxu0 0.0
        %1682 = vmatpush2.msra.mxu0 0.0
        %1683 = vmatprep.subr.mxu0 0.0
        %1684 = vmatpush2.msra.mxu0 0.0
        %1685 = vmatprep.subr.mxu0 0.0
        %1686 = vmatpush2.msra.mxu0 0.0
        %1687 = vmatprep.subr.mxu0 0.0
        %1688 = vmatpush2.msra.mxu0 0.0
        %1689 = vmatprep.subr.mxu0 0.0
        %1690 = vmatpush2.msra.mxu0 0.0
        %1691 = vmatprep.subr.mxu0 0.0
        %1692 = vmatpush2.msra.mxu0 0.0
        %1693 = vmatprep.subr.mxu0 0.0
        %1694 = vmatpush2.msra.mxu0 0.0
        %1695 = vmatprep.subr.mxu0 0.0
        %1696 = vmatpush2.msra.mxu0 0.0
        %1697 = vmatprep.mubr.f32.mxu0 0.0
        %1698 = vmatmul.mubr.f32.gmra.mxu0 %v1631
        %v1699 = vpop.f32.mrf.mxu0
        %v1700 = vadd.f32 %v1626, %v1699
        %v1701 = vpop.f32.mrf.mxu0
        %v1702 = vadd.f32 %v1628, %v1701
        %1703 = vdwg.mxu0
        %1704 = vrot.lane.b32.xlu0 %v1494, 15
        %v1705 = vpop.permute.xlu0 %1704
        %1706 = vrot.lane.b32.xlu0 %v1496, 15
        %v1707 = vpop.permute.xlu0 %1706
        %1708 = vrot.lane.b32.xlu0 %v1495, 15
        %v1709 = vpop.permute.xlu0 %1708
        %1710 = vrot.lane.b32.xlu0 %v1497, 15
        %v1711 = vpop.permute.xlu0 %1710
        %v1712 = vsel %vm675, %v1705, %v1709
        %v1713 = vsel %vm675, %v1707, %v1711
        %v1714 = vsel %vm675, %v1709, %v1705
        %v1715 = vsel %vm675, %v1711, %v1707
        %v1716 = vld [vmem:[%s680] ss:$8 sm:$0x3]
        %v1718 = vlaneseq
        %v1719 = vshrl.u32 %v1718, 7
        %v1720 = vsub.s32 0, %v1719
        %v1721 = vrot.slane %v1716, %v1720
        %v1722 = vlaneseq
        %v1723 = vshrl.u32 %v1722, 7
        %v1724 = vsub.s32 1, %v1723
        %v1725 = vrot.slane %v1716, %v1724
        %v1728 = vmul.f32 %v1714, %v1721
        %v1729 = vmul.f32 %v1712, %v1725
        %v1730 = vmul.f32 %v1715, %v1721
        %v1731 = vmul.f32 %v1713, %v1725
        %v1732 = vld [vmem:[%s697] sm:$0xf]
        %v1734 = vsel %vm518, %v1732, 0
        %1736 = vmatprep.subr.mxu0 0.0
        %1737 = vmatpush1.msra.mxu0 0.0
        %1738 = vmatprep.subr.mxu0 0.0
        %1739 = vmatpush1.msra.mxu0 0.0
        %1740 = vmatprep.subr.mxu0 0.0
        %1741 = vmatpush1.msra.mxu0 0.0
        %1742 = vmatprep.subr.mxu0 0.0
        %1743 = vmatpush1.msra.mxu0 0.0
        %1744 = vmatprep.subr.mxu0 0.0
        %1745 = vmatpush1.msra.mxu0 0.0
        %1746 = vmatprep.subr.mxu0 0.0
        %1747 = vmatpush1.msra.mxu0 0.0
        %1748 = vmatprep.subr.mxu0 0.0
        %1749 = vmatpush1.msra.mxu0 0.0
        %1750 = vmatprep.subr.mxu0 0.0
        %1751 = vmatpush1.msra.mxu0 0.0
        %1752 = vmatprep.subr.mxu0 0.0
        %1753 = vmatpush1.msra.mxu0 0.0
        %1754 = vmatprep.subr.mxu0 0.0
        %1755 = vmatpush1.msra.mxu0 0.0
        %1756 = vmatprep.subr.mxu0 0.0
        %1757 = vmatpush1.msra.mxu0 0.0
        %1758 = vmatprep.subr.mxu0 0.0
        %1759 = vmatpush1.msra.mxu0 0.0
        %1760 = vmatprep.subr.mxu0 0.0
        %1761 = vmatpush1.msra.mxu0 0.0
        %1762 = vmatprep.subr.mxu0 0.0
        %1763 = vmatpush1.msra.mxu0 0.0
        %1764 = vmatprep.subr.mxu0 %v1731
        %1765 = vmatpush1.msra.mxu0 %v1730
        %1766 = vmatprep.subr.mxu0 %v1729
        %1767 = vmatpush1.msra.mxu0 %v1728
        %1768 = vmatprep.subr.mxu0 0.0
        %1769 = vmatpush2.msra.mxu0 0.0
        %1770 = vmatprep.subr.mxu0 0.0
        %1771 = vmatpush2.msra.mxu0 0.0
        %1772 = vmatprep.subr.mxu0 0.0
        %1773 = vmatpush2.msra.mxu0 0.0
        %1774 = vmatprep.subr.mxu0 0.0
        %1775 = vmatpush2.msra.mxu0 0.0
        %1776 = vmatprep.subr.mxu0 0.0
        %1777 = vmatpush2.msra.mxu0 0.0
        %1778 = vmatprep.subr.mxu0 0.0
        %1779 = vmatpush2.msra.mxu0 0.0
        %1780 = vmatprep.subr.mxu0 0.0
        %1781 = vmatpush2.msra.mxu0 0.0
        %1782 = vmatprep.subr.mxu0 0.0
        %1783 = vmatpush2.msra.mxu0 0.0
        %1784 = vmatprep.subr.mxu0 0.0
        %1785 = vmatpush2.msra.mxu0 0.0
        %1786 = vmatprep.subr.mxu0 0.0
        %1787 = vmatpush2.msra.mxu0 0.0
        %1788 = vmatprep.subr.mxu0 0.0
        %1789 = vmatpush2.msra.mxu0 0.0
        %1790 = vmatprep.subr.mxu0 0.0
        %1791 = vmatpush2.msra.mxu0 0.0
        %1792 = vmatprep.subr.mxu0 0.0
        %1793 = vmatpush2.msra.mxu0 0.0
        %1794 = vmatprep.subr.mxu0 0.0
        %1795 = vmatpush2.msra.mxu0 0.0
        %1796 = vmatprep.subr.mxu0 0.0
        %1797 = vmatpush2.msra.mxu0 0.0
        %1798 = vmatprep.subr.mxu0 0.0
        %1799 = vmatpush2.msra.mxu0 0.0
        %1800 = vmatprep.mubr.f32.mxu0 0.0
        %1801 = vmatmul.mubr.f32.gmra.mxu0 %v1734
        %v1802 = vpop.f32.mrf.mxu0
        %v1803 = vadd.f32 0.0, %v1802
        %v1804 = vpop.f32.mrf.mxu0
        %v1805 = vadd.f32 0.0, %v1804
        %1806 = vdwg.mxu0
        %v1807 = vadd.f32 %v1700, %v1803
        %v1808 = vadd.f32 %v1702, %v1805
        %1809 = vrot.lane.b32.xlu0 %v1494, 1
        %v1810 = vpop.permute.xlu0 %1809
        %1811 = vrot.lane.b32.xlu0 %v1496, 1
        %v1812 = vpop.permute.xlu0 %1811
        %1813 = vrot.lane.b32.xlu0 %v1495, 1
        %v1814 = vpop.permute.xlu0 %1813
        %1815 = vrot.lane.b32.xlu0 %v1497, 1
        %v1816 = vpop.permute.xlu0 %1815
        %v1817 = vsel %vm783, %v1810, %v1814
        %v1818 = vsel %vm783, %v1812, %v1816
        %v1819 = vsel %vm783, %v1814, %v1810
        %v1820 = vsel %vm783, %v1816, %v1812
        %v1821 = vld [vmem:[%s788] ss:$8 sm:$0x3]
        %v1823 = vlaneseq
        %v1824 = vshrl.u32 %v1823, 7
        %v1825 = vsub.s32 0, %v1824
        %v1826 = vrot.slane %v1821, %v1825
        %v1827 = vlaneseq
        %v1828 = vshrl.u32 %v1827, 7
        %v1829 = vsub.s32 1, %v1828
        %v1830 = vrot.slane %v1821, %v1829
        %v1833 = vmul.f32 %v1819, %v1826
        %v1834 = vmul.f32 %v1817, %v1830
        %v1835 = vmul.f32 %v1820, %v1826
        %v1836 = vmul.f32 %v1818, %v1830
        %v1837 = vld [vmem:[%s805] sm:$0xf]
        %v1839 = vsel %vm518, %v1837, 0
        %1841 = vmatprep.subr.mxu0 0.0
        %1842 = vmatpush1.msra.mxu0 0.0
        %1843 = vmatprep.subr.mxu0 0.0
        %1844 = vmatpush1.msra.mxu0 0.0
        %1845 = vmatprep.subr.mxu0 0.0
        %1846 = vmatpush1.msra.mxu0 0.0
        %1847 = vmatprep.subr.mxu0 0.0
        %1848 = vmatpush1.msra.mxu0 0.0
        %1849 = vmatprep.subr.mxu0 0.0
        %1850 = vmatpush1.msra.mxu0 0.0
        %1851 = vmatprep.subr.mxu0 0.0
        %1852 = vmatpush1.msra.mxu0 0.0
        %1853 = vmatprep.subr.mxu0 0.0
        %1854 = vmatpush1.msra.mxu0 0.0
        %1855 = vmatprep.subr.mxu0 0.0
        %1856 = vmatpush1.msra.mxu0 0.0
        %1857 = vmatprep.subr.mxu0 0.0
        %1858 = vmatpush1.msra.mxu0 0.0
        %1859 = vmatprep.subr.mxu0 0.0
        %1860 = vmatpush1.msra.mxu0 0.0
        %1861 = vmatprep.subr.mxu0 0.0
        %1862 = vmatpush1.msra.mxu0 0.0
        %1863 = vmatprep.subr.mxu0 0.0
        %1864 = vmatpush1.msra.mxu0 0.0
        %1865 = vmatprep.subr.mxu0 0.0
        %1866 = vmatpush1.msra.mxu0 0.0
        %1867 = vmatprep.subr.mxu0 0.0
        %1868 = vmatpush1.msra.mxu0 0.0
        %1869 = vmatprep.subr.mxu0 %v1836
        %1870 = vmatpush1.msra.mxu0 %v1835
        %1871 = vmatprep.subr.mxu0 %v1834
        %1872 = vmatpush1.msra.mxu0 %v1833
        %1873 = vmatprep.subr.mxu0 0.0
        %1874 = vmatpush2.msra.mxu0 0.0
        %1875 = vmatprep.subr.mxu0 0.0
        %1876 = vmatpush2.msra.mxu0 0.0
        %1877 = vmatprep.subr.mxu0 0.0
        %1878 = vmatpush2.msra.mxu0 0.0
        %1879 = vmatprep.subr.mxu0 0.0
        %1880 = vmatpush2.msra.mxu0 0.0
        %1881 = vmatprep.subr.mxu0 0.0
        %1882 = vmatpush2.msra.mxu0 0.0
        %1883 = vmatprep.subr.mxu0 0.0
        %1884 = vmatpush2.msra.mxu0 0.0
        %1885 = vmatprep.subr.mxu0 0.0
        %1886 = vmatpush2.msra.mxu0 0.0
        %1887 = vmatprep.subr.mxu0 0.0
        %1888 = vmatpush2.msra.mxu0 0.0
        %1889 = vmatprep.subr.mxu0 0.0
        %1890 = vmatpush2.msra.mxu0 0.0
        %1891 = vmatprep.subr.mxu0 0.0
        %1892 = vmatpush2.msra.mxu0 0.0
        %1893 = vmatprep.subr.mxu0 0.0
        %1894 = vmatpush2.msra.mxu0 0.0
        %1895 = vmatprep.subr.mxu0 0.0
        %1896 = vmatpush2.msra.mxu0 0.0
        %1897 = vmatprep.subr.mxu0 0.0
        %1898 = vmatpush2.msra.mxu0 0.0
        %1899 = vmatprep.subr.mxu0 0.0
        %1900 = vmatpush2.msra.mxu0 0.0
        %1901 = vmatprep.subr.mxu0 0.0
        %1902 = vmatpush2.msra.mxu0 0.0
        %1903 = vmatprep.subr.mxu0 0.0
        %1904 = vmatpush2.msra.mxu0 0.0
        %1905 = vmatprep.mubr.f32.mxu0 0.0
        %1906 = vmatmul.mubr.f32.gmra.mxu0 %v1839
        %v1907 = vpop.f32.mrf.mxu0
        %v1908 = vadd.f32 0.0, %v1907
        %v1909 = vpop.f32.mrf.mxu0
        %v1910 = vadd.f32 0.0, %v1909
        %1911 = vdwg.mxu0
        %v1912 = vadd.f32 %v1807, %v1908
        %v1913 = vadd.f32 %v1808, %v1910
        %v1914 = vld [vmem:[%s883] sm:$0xf]
        %v1916 = vsel %vm518, %v1914, 0
        %1918 = vmatprep.subr.mxu0 0.0
        %1919 = vmatpush1.msra.mxu0 0.0
        %1920 = vmatprep.subr.mxu0 0.0
        %1921 = vmatpush1.msra.mxu0 0.0
        %1922 = vmatprep.subr.mxu0 0.0
        %1923 = vmatpush1.msra.mxu0 0.0
        %1924 = vmatprep.subr.mxu0 0.0
        %1925 = vmatpush1.msra.mxu0 0.0
        %1926 = vmatprep.subr.mxu0 0.0
        %1927 = vmatpush1.msra.mxu0 0.0
        %1928 = vmatprep.subr.mxu0 0.0
        %1929 = vmatpush1.msra.mxu0 0.0
        %1930 = vmatprep.subr.mxu0 0.0
        %1931 = vmatpush1.msra.mxu0 0.0
        %1932 = vmatprep.subr.mxu0 0.0
        %1933 = vmatpush1.msra.mxu0 0.0
        %1934 = vmatprep.subr.mxu0 0.0
        %1935 = vmatpush1.msra.mxu0 0.0
        %1936 = vmatprep.subr.mxu0 0.0
        %1937 = vmatpush1.msra.mxu0 0.0
        %1938 = vmatprep.subr.mxu0 0.0
        %1939 = vmatpush1.msra.mxu0 0.0
        %1940 = vmatprep.subr.mxu0 0.0
        %1941 = vmatpush1.msra.mxu0 0.0
        %1942 = vmatprep.subr.mxu0 0.0
        %1943 = vmatpush1.msra.mxu0 0.0
        %1944 = vmatprep.subr.mxu0 0.0
        %1945 = vmatpush1.msra.mxu0 0.0
        %1946 = vmatprep.subr.mxu0 %v1497
        %1947 = vmatpush1.msra.mxu0 %v1496
        %1948 = vmatprep.subr.mxu0 %v1495
        %1949 = vmatpush1.msra.mxu0 %v1494
        %1950 = vmatprep.subr.mxu0 0.0
        %1951 = vmatpush2.msra.mxu0 0.0
        %1952 = vmatprep.subr.mxu0 0.0
        %1953 = vmatpush2.msra.mxu0 0.0
        %1954 = vmatprep.subr.mxu0 0.0
        %1955 = vmatpush2.msra.mxu0 0.0
        %1956 = vmatprep.subr.mxu0 0.0
        %1957 = vmatpush2.msra.mxu0 0.0
        %1958 = vmatprep.subr.mxu0 0.0
        %1959 = vmatpush2.msra.mxu0 0.0
        %1960 = vmatprep.subr.mxu0 0.0
        %1961 = vmatpush2.msra.mxu0 0.0
        %1962 = vmatprep.subr.mxu0 0.0
        %1963 = vmatpush2.msra.mxu0 0.0
        %1964 = vmatprep.subr.mxu0 0.0
        %1965 = vmatpush2.msra.mxu0 0.0
        %1966 = vmatprep.subr.mxu0 0.0
        %1967 = vmatpush2.msra.mxu0 0.0
        %1968 = vmatprep.subr.mxu0 0.0
        %1969 = vmatpush2.msra.mxu0 0.0
        %1970 = vmatprep.subr.mxu0 0.0
        %1971 = vmatpush2.msra.mxu0 0.0
        %1972 = vmatprep.subr.mxu0 0.0
        %1973 = vmatpush2.msra.mxu0 0.0
        %1974 = vmatprep.subr.mxu0 0.0
        %1975 = vmatpush2.msra.mxu0 0.0
        %1976 = vmatprep.subr.mxu0 0.0
        %1977 = vmatpush2.msra.mxu0 0.0
        %1978 = vmatprep.subr.mxu0 0.0
        %1979 = vmatpush2.msra.mxu0 0.0
        %1980 = vmatprep.subr.mxu0 0.0
        %1981 = vmatpush2.msra.mxu0 0.0
        %1982 = vmatprep.mubr.f32.mxu0 0.0
        %1983 = vmatmul.mubr.f32.gmra.mxu0 %v1916
        %v1984 = vpop.f32.mrf.mxu0
        %v1985 = vadd.f32 0.0, %v1984
        %v1986 = vpop.f32.mrf.mxu0
        %v1987 = vadd.f32 0.0, %v1986
        %1988 = vdwg.mxu0
        %v1989 = vadd.f32 %v1912, %v1985
        %v1990 = vadd.f32 %v1913, %v1987
        %1991 = vrot.lane.b32.xlu0 %v1494, 127
        %v1992 = vpop.permute.xlu0 %1991
        %1993 = vrot.lane.b32.xlu0 %v1496, 127
        %v1994 = vpop.permute.xlu0 %1993
        %1995 = vrot.lane.b32.xlu0 %v1495, 127
        %v1996 = vpop.permute.xlu0 %1995
        %1997 = vrot.lane.b32.xlu0 %v1497, 127
        %v1998 = vpop.permute.xlu0 %1997
        %v1999 = vsel %vm969, %v1992, %v1996
        %v2000 = vsel %vm969, %v1994, %v1998
        %v2001 = vsel %vm969, %v1996, %v1992
        %v2002 = vsel %vm969, %v1998, %v1994
        %v2003 = vld [vmem:[%s974] ss:$8 sm:$0x3]
        %v2005 = vlaneseq
        %v2006 = vshrl.u32 %v2005, 7
        %v2007 = vsub.s32 0, %v2006
        %v2008 = vrot.slane %v2003, %v2007
        %v2009 = vlaneseq
        %v2010 = vshrl.u32 %v2009, 7
        %v2011 = vsub.s32 1, %v2010
        %v2012 = vrot.slane %v2003, %v2011
        %v2015 = vmul.f32 %v1999, %v2008
        %v2016 = vmul.f32 %v2001, %v2012
        %v2017 = vmul.f32 %v2000, %v2008
        %v2018 = vmul.f32 %v2002, %v2012
        %v2019 = vld [vmem:[%s991] sm:$0xf]
        %v2021 = vsel %vm518, %v2019, 0
        %2023 = vmatprep.subr.mxu0 0.0
        %2024 = vmatpush1.msra.mxu0 0.0
        %2025 = vmatprep.subr.mxu0 0.0
        %2026 = vmatpush1.msra.mxu0 0.0
        %2027 = vmatprep.subr.mxu0 0.0
        %2028 = vmatpush1.msra.mxu0 0.0
        %2029 = vmatprep.subr.mxu0 0.0
        %2030 = vmatpush1.msra.mxu0 0.0
        %2031 = vmatprep.subr.mxu0 0.0
        %2032 = vmatpush1.msra.mxu0 0.0
        %2033 = vmatprep.subr.mxu0 0.0
        %2034 = vmatpush1.msra.mxu0 0.0
        %2035 = vmatprep.subr.mxu0 0.0
        %2036 = vmatpush1.msra.mxu0 0.0
        %2037 = vmatprep.subr.mxu0 0.0
        %2038 = vmatpush1.msra.mxu0 0.0
        %2039 = vmatprep.subr.mxu0 0.0
        %2040 = vmatpush1.msra.mxu0 0.0
        %2041 = vmatprep.subr.mxu0 0.0
        %2042 = vmatpush1.msra.mxu0 0.0
        %2043 = vmatprep.subr.mxu0 0.0
        %2044 = vmatpush1.msra.mxu0 0.0
        %2045 = vmatprep.subr.mxu0 0.0
        %2046 = vmatpush1.msra.mxu0 0.0
        %2047 = vmatprep.subr.mxu0 0.0
        %2048 = vmatpush1.msra.mxu0 0.0
        %2049 = vmatprep.subr.mxu0 0.0
        %2050 = vmatpush1.msra.mxu0 0.0
        %2051 = vmatprep.subr.mxu0 %v2018
        %2052 = vmatpush1.msra.mxu0 %v2017
        %2053 = vmatprep.subr.mxu0 %v2016
        %2054 = vmatpush1.msra.mxu0 %v2015
        %2055 = vmatprep.subr.mxu0 0.0
        %2056 = vmatpush2.msra.mxu0 0.0
        %2057 = vmatprep.subr.mxu0 0.0
        %2058 = vmatpush2.msra.mxu0 0.0
        %2059 = vmatprep.subr.mxu0 0.0
        %2060 = vmatpush2.msra.mxu0 0.0
        %2061 = vmatprep.subr.mxu0 0.0
        %2062 = vmatpush2.msra.mxu0 0.0
        %2063 = vmatprep.subr.mxu0 0.0
        %2064 = vmatpush2.msra.mxu0 0.0
        %2065 = vmatprep.subr.mxu0 0.0
        %2066 = vmatpush2.msra.mxu0 0.0
        %2067 = vmatprep.subr.mxu0 0.0
        %2068 = vmatpush2.msra.mxu0 0.0
        %2069 = vmatprep.subr.mxu0 0.0
        %2070 = vmatpush2.msra.mxu0 0.0
        %2071 = vmatprep.subr.mxu0 0.0
        %2072 = vmatpush2.msra.mxu0 0.0
        %2073 = vmatprep.subr.mxu0 0.0
        %2074 = vmatpush2.msra.mxu0 0.0
        %2075 = vmatprep.subr.mxu0 0.0
        %2076 = vmatpush2.msra.mxu0 0.0
        %2077 = vmatprep.subr.mxu0 0.0
        %2078 = vmatpush2.msra.mxu0 0.0
        %2079 = vmatprep.subr.mxu0 0.0
        %2080 = vmatpush2.msra.mxu0 0.0
        %2081 = vmatprep.subr.mxu0 0.0
        %2082 = vmatpush2.msra.mxu0 0.0
        %2083 = vmatprep.subr.mxu0 0.0
        %2084 = vmatpush2.msra.mxu0 0.0
        %2085 = vmatprep.subr.mxu0 0.0
        %2086 = vmatpush2.msra.mxu0 0.0
        %2087 = vmatprep.mubr.f32.mxu0 0.0
        %2088 = vmatmul.mubr.f32.gmra.mxu0 %v2021
        %v2089 = vpop.f32.mrf.mxu0
        %v2090 = vadd.f32 0.0, %v2089
        %v2091 = vpop.f32.mrf.mxu0
        %v2092 = vadd.f32 0.0, %v2091
        %2093 = vdwg.mxu0
        %v2094 = vadd.f32 %v1989, %v2090
        %v2095 = vadd.f32 %v1990, %v2092
        %2096 = vrot.lane.b32.xlu0 %v1494, 113
        %v2097 = vpop.permute.xlu0 %2096
        %2098 = vrot.lane.b32.xlu0 %v1496, 113
        %v2099 = vpop.permute.xlu0 %2098
        %2100 = vrot.lane.b32.xlu0 %v1495, 113
        %v2101 = vpop.permute.xlu0 %2100
        %2102 = vrot.lane.b32.xlu0 %v1497, 113
        %v2103 = vpop.permute.xlu0 %2102
        %v2104 = vsel %vm1077, %v2097, %v2101
        %v2105 = vsel %vm1077, %v2099, %v2103
        %v2106 = vsel %vm1077, %v2101, %v2097
        %v2107 = vsel %vm1077, %v2103, %v2099
        %v2108 = vld [vmem:[%s1082] ss:$8 sm:$0x3]
        %v2110 = vlaneseq
        %v2111 = vshrl.u32 %v2110, 7
        %v2112 = vsub.s32 0, %v2111
        %v2113 = vrot.slane %v2108, %v2112
        %v2114 = vlaneseq
        %v2115 = vshrl.u32 %v2114, 7
        %v2116 = vsub.s32 1, %v2115
        %v2117 = vrot.slane %v2108, %v2116
        %v2120 = vmul.f32 %v2104, %v2113
        %v2121 = vmul.f32 %v2106, %v2117
        %v2122 = vmul.f32 %v2105, %v2113
        %v2123 = vmul.f32 %v2107, %v2117
        %v2124 = vld [vmem:[%s1099] sm:$0xf]
        %v2126 = vsel %vm518, %v2124, 0
        %2128 = vmatprep.subr.mxu0 0.0
        %2129 = vmatpush1.msra.mxu0 0.0
        %2130 = vmatprep.subr.mxu0 0.0
        %2131 = vmatpush1.msra.mxu0 0.0
        %2132 = vmatprep.subr.mxu0 0.0
        %2133 = vmatpush1.msra.mxu0 0.0
        %2134 = vmatprep.subr.mxu0 0.0
        %2135 = vmatpush1.msra.mxu0 0.0
        %2136 = vmatprep.subr.mxu0 0.0
        %2137 = vmatpush1.msra.mxu0 0.0
        %2138 = vmatprep.subr.mxu0 0.0
        %2139 = vmatpush1.msra.mxu0 0.0
        %2140 = vmatprep.subr.mxu0 0.0
        %2141 = vmatpush1.msra.mxu0 0.0
        %2142 = vmatprep.subr.mxu0 0.0
        %2143 = vmatpush1.msra.mxu0 0.0
        %2144 = vmatprep.subr.mxu0 0.0
        %2145 = vmatpush1.msra.mxu0 0.0
        %2146 = vmatprep.subr.mxu0 0.0
        %2147 = vmatpush1.msra.mxu0 0.0
        %2148 = vmatprep.subr.mxu0 0.0
        %2149 = vmatpush1.msra.mxu0 0.0
        %2150 = vmatprep.subr.mxu0 0.0
        %2151 = vmatpush1.msra.mxu0 0.0
        %2152 = vmatprep.subr.mxu0 0.0
        %2153 = vmatpush1.msra.mxu0 0.0
        %2154 = vmatprep.subr.mxu0 0.0
        %2155 = vmatpush1.msra.mxu0 0.0
        %2156 = vmatprep.subr.mxu0 %v2123
        %2157 = vmatpush1.msra.mxu0 %v2122
        %2158 = vmatprep.subr.mxu0 %v2121
        %2159 = vmatpush1.msra.mxu0 %v2120
        %2160 = vmatprep.subr.mxu0 0.0
        %2161 = vmatpush2.msra.mxu0 0.0
        %2162 = vmatprep.subr.mxu0 0.0
        %2163 = vmatpush2.msra.mxu0 0.0
        %2164 = vmatprep.subr.mxu0 0.0
        %2165 = vmatpush2.msra.mxu0 0.0
        %2166 = vmatprep.subr.mxu0 0.0
        %2167 = vmatpush2.msra.mxu0 0.0
        %2168 = vmatprep.subr.mxu0 0.0
        %2169 = vmatpush2.msra.mxu0 0.0
        %2170 = vmatprep.subr.mxu0 0.0
        %2171 = vmatpush2.msra.mxu0 0.0
        %2172 = vmatprep.subr.mxu0 0.0
        %2173 = vmatpush2.msra.mxu0 0.0
        %2174 = vmatprep.subr.mxu0 0.0
        %2175 = vmatpush2.msra.mxu0 0.0
        %2176 = vmatprep.subr.mxu0 0.0
        %2177 = vmatpush2.msra.mxu0 0.0
        %2178 = vmatprep.subr.mxu0 0.0
        %2179 = vmatpush2.msra.mxu0 0.0
        %2180 = vmatprep.subr.mxu0 0.0
        %2181 = vmatpush2.msra.mxu0 0.0
        %2182 = vmatprep.subr.mxu0 0.0
        %2183 = vmatpush2.msra.mxu0 0.0
        %2184 = vmatprep.subr.mxu0 0.0
        %2185 = vmatpush2.msra.mxu0 0.0
        %2186 = vmatprep.subr.mxu0 0.0
        %2187 = vmatpush2.msra.mxu0 0.0
        %2188 = vmatprep.subr.mxu0 0.0
        %2189 = vmatpush2.msra.mxu0 0.0
        %2190 = vmatprep.subr.mxu0 0.0
        %2191 = vmatpush2.msra.mxu0 0.0
        %2192 = vmatprep.mubr.f32.mxu0 0.0
        %2193 = vmatmul.mubr.f32.gmra.mxu0 %v2126
        %v2194 = vpop.f32.mrf.mxu0
        %v2195 = vadd.f32 0.0, %v2194
        %v2196 = vpop.f32.mrf.mxu0
        %v2197 = vadd.f32 0.0, %v2196
        %2198 = vdwg.mxu0
        %v2199 = vadd.f32 %v2094, %v2195
        %v2200 = vadd.f32 %v2095, %v2197
        %2201 = vrot.lane.b32.xlu0 %v1494, 112
        %v2202 = vpop.permute.xlu0 %2201
        %2203 = vrot.lane.b32.xlu0 %v1496, 112
        %v2204 = vpop.permute.xlu0 %2203
        %2205 = vrot.lane.b32.xlu0 %v1495, 112
        %v2206 = vpop.permute.xlu0 %2205
        %2207 = vrot.lane.b32.xlu0 %v1497, 112
        %v2208 = vpop.permute.xlu0 %2207
        %v2209 = vsel %vm1185, %v2202, %v2206
        %v2210 = vsel %vm1185, %v2204, %v2208
        %v2211 = vsel %vm1185, %v2206, %v2202
        %v2212 = vsel %vm1185, %v2208, %v2204
        %v2213 = vld [vmem:[%s1190] ss:$8 sm:$0x3]
        %v2215 = vlaneseq
        %v2216 = vshrl.u32 %v2215, 7
        %v2217 = vsub.s32 0, %v2216
        %v2218 = vrot.slane %v2213, %v2217
        %v2219 = vlaneseq
        %v2220 = vshrl.u32 %v2219, 7
        %v2221 = vsub.s32 1, %v2220
        %v2222 = vrot.slane %v2213, %v2221
        %v2225 = vmul.f32 %v2209, %v2218
        %v2226 = vmul.f32 %v2211, %v2222
        %v2227 = vmul.f32 %v2210, %v2218
        %v2228 = vmul.f32 %v2212, %v2222
        %v2229 = vld [vmem:[%s1207] sm:$0xf]
        %v2231 = vsel %vm518, %v2229, 0
        %2233 = vmatprep.subr.mxu0 0.0
        %2234 = vmatpush1.msra.mxu0 0.0
        %2235 = vmatprep.subr.mxu0 0.0
        %2236 = vmatpush1.msra.mxu0 0.0
        %2237 = vmatprep.subr.mxu0 0.0
        %2238 = vmatpush1.msra.mxu0 0.0
        %2239 = vmatprep.subr.mxu0 0.0
        %2240 = vmatpush1.msra.mxu0 0.0
        %2241 = vmatprep.subr.mxu0 0.0
        %2242 = vmatpush1.msra.mxu0 0.0
        %2243 = vmatprep.subr.mxu0 0.0
        %2244 = vmatpush1.msra.mxu0 0.0
        %2245 = vmatprep.subr.mxu0 0.0
        %2246 = vmatpush1.msra.mxu0 0.0
        %2247 = vmatprep.subr.mxu0 0.0
        %2248 = vmatpush1.msra.mxu0 0.0
        %2249 = vmatprep.subr.mxu0 0.0
        %2250 = vmatpush1.msra.mxu0 0.0
        %2251 = vmatprep.subr.mxu0 0.0
        %2252 = vmatpush1.msra.mxu0 0.0
        %2253 = vmatprep.subr.mxu0 0.0
        %2254 = vmatpush1.msra.mxu0 0.0
        %2255 = vmatprep.subr.mxu0 0.0
        %2256 = vmatpush1.msra.mxu0 0.0
        %2257 = vmatprep.subr.mxu0 0.0
        %2258 = vmatpush1.msra.mxu0 0.0
        %2259 = vmatprep.subr.mxu0 0.0
        %2260 = vmatpush1.msra.mxu0 0.0
        %2261 = vmatprep.subr.mxu0 %v2228
        %2262 = vmatpush1.msra.mxu0 %v2227
        %2263 = vmatprep.subr.mxu0 %v2226
        %2264 = vmatpush1.msra.mxu0 %v2225
        %2265 = vmatprep.subr.mxu0 0.0
        %2266 = vmatpush2.msra.mxu0 0.0
        %2267 = vmatprep.subr.mxu0 0.0
        %2268 = vmatpush2.msra.mxu0 0.0
        %2269 = vmatprep.subr.mxu0 0.0
        %2270 = vmatpush2.msra.mxu0 0.0
        %2271 = vmatprep.subr.mxu0 0.0
        %2272 = vmatpush2.msra.mxu0 0.0
        %2273 = vmatprep.subr.mxu0 0.0
        %2274 = vmatpush2.msra.mxu0 0.0
        %2275 = vmatprep.subr.mxu0 0.0
        %2276 = vmatpush2.msra.mxu0 0.0
        %2277 = vmatprep.subr.mxu0 0.0
        %2278 = vmatpush2.msra.mxu0 0.0
        %2279 = vmatprep.subr.mxu0 0.0
        %2280 = vmatpush2.msra.mxu0 0.0
        %2281 = vmatprep.subr.mxu0 0.0
        %2282 = vmatpush2.msra.mxu0 0.0
        %2283 = vmatprep.subr.mxu0 0.0
        %2284 = vmatpush2.msra.mxu0 0.0
        %2285 = vmatprep.subr.mxu0 0.0
        %2286 = vmatpush2.msra.mxu0 0.0
        %2287 = vmatprep.subr.mxu0 0.0
        %2288 = vmatpush2.msra.mxu0 0.0
        %2289 = vmatprep.subr.mxu0 0.0
        %2290 = vmatpush2.msra.mxu0 0.0
        %2291 = vmatprep.subr.mxu0 0.0
        %2292 = vmatpush2.msra.mxu0 0.0
        %2293 = vmatprep.subr.mxu0 0.0
        %2294 = vmatpush2.msra.mxu0 0.0
        %2295 = vmatprep.subr.mxu0 0.0
        %2296 = vmatpush2.msra.mxu0 0.0
        %2297 = vmatprep.mubr.f32.mxu0 0.0
        %2298 = vmatmul.mubr.f32.gmra.mxu0 %v2231
        %v2299 = vpop.f32.mrf.mxu0
        %v2300 = vadd.f32 0.0, %v2299
        %v2301 = vpop.f32.mrf.mxu0
        %v2302 = vadd.f32 0.0, %v2301
        %2303 = vdwg.mxu0
        %v2304 = vadd.f32 %v2199, %v2300
        %v2305 = vadd.f32 %v2200, %v2302
        %2306 = vrot.lane.b32.xlu0 %v1494, 111
        %v2307 = vpop.permute.xlu0 %2306
        %2308 = vrot.lane.b32.xlu0 %v1496, 111
        %v2309 = vpop.permute.xlu0 %2308
        %2310 = vrot.lane.b32.xlu0 %v1495, 111
        %v2311 = vpop.permute.xlu0 %2310
        %2312 = vrot.lane.b32.xlu0 %v1497, 111
        %v2313 = vpop.permute.xlu0 %2312
        %v2314 = vsel %vm1293, %v2307, %v2311
        %v2315 = vsel %vm1293, %v2309, %v2313
        %v2316 = vsel %vm1293, %v2311, %v2307
        %v2317 = vsel %vm1293, %v2313, %v2309
        %v2318 = vld [vmem:[%s1298] ss:$8 sm:$0x3]
        %v2320 = vlaneseq
        %v2321 = vshrl.u32 %v2320, 7
        %v2322 = vsub.s32 0, %v2321
        %v2323 = vrot.slane %v2318, %v2322
        %v2324 = vlaneseq
        %v2325 = vshrl.u32 %v2324, 7
        %v2326 = vsub.s32 1, %v2325
        %v2327 = vrot.slane %v2318, %v2326
        %v2330 = vmul.f32 %v2314, %v2323
        %v2331 = vmul.f32 %v2316, %v2327
        %v2332 = vmul.f32 %v2315, %v2323
        %v2333 = vmul.f32 %v2317, %v2327
        %v2334 = vld [vmem:[%s1315] sm:$0xf]
        %v2336 = vsel %vm518, %v2334, 0
        %2338 = vmatprep.subr.mxu0 0.0
        %2339 = vmatpush1.msra.mxu0 0.0
        %2340 = vmatprep.subr.mxu0 0.0
        %2341 = vmatpush1.msra.mxu0 0.0
        %2342 = vmatprep.subr.mxu0 0.0
        %2343 = vmatpush1.msra.mxu0 0.0
        %2344 = vmatprep.subr.mxu0 0.0
        %2345 = vmatpush1.msra.mxu0 0.0
        %2346 = vmatprep.subr.mxu0 0.0
        %2347 = vmatpush1.msra.mxu0 0.0
        %2348 = vmatprep.subr.mxu0 0.0
        %2349 = vmatpush1.msra.mxu0 0.0
        %2350 = vmatprep.subr.mxu0 0.0
        %2351 = vmatpush1.msra.mxu0 0.0
        %2352 = vmatprep.subr.mxu0 0.0
        %2353 = vmatpush1.msra.mxu0 0.0
        %2354 = vmatprep.subr.mxu0 0.0
        %2355 = vmatpush1.msra.mxu0 0.0
        %2356 = vmatprep.subr.mxu0 0.0
        %2357 = vmatpush1.msra.mxu0 0.0
        %2358 = vmatprep.subr.mxu0 0.0
        %2359 = vmatpush1.msra.mxu0 0.0
        %2360 = vmatprep.subr.mxu0 0.0
        %2361 = vmatpush1.msra.mxu0 0.0
        %2362 = vmatprep.subr.mxu0 0.0
        %2363 = vmatpush1.msra.mxu0 0.0
        %2364 = vmatprep.subr.mxu0 0.0
        %2365 = vmatpush1.msra.mxu0 0.0
        %2366 = vmatprep.subr.mxu0 %v2333
        %2367 = vmatpush1.msra.mxu0 %v2332
        %2368 = vmatprep.subr.mxu0 %v2331
        %2369 = vmatpush1.msra.mxu0 %v2330
        %2370 = vmatprep.subr.mxu0 0.0
        %2371 = vmatpush2.msra.mxu0 0.0
        %2372 = vmatprep.subr.mxu0 0.0
        %2373 = vmatpush2.msra.mxu0 0.0
        %2374 = vmatprep.subr.mxu0 0.0
        %2375 = vmatpush2.msra.mxu0 0.0
        %2376 = vmatprep.subr.mxu0 0.0
        %2377 = vmatpush2.msra.mxu0 0.0
        %2378 = vmatprep.subr.mxu0 0.0
        %2379 = vmatpush2.msra.mxu0 0.0
        %2380 = vmatprep.subr.mxu0 0.0
        %2381 = vmatpush2.msra.mxu0 0.0
        %2382 = vmatprep.subr.mxu0 0.0
        %2383 = vmatpush2.msra.mxu0 0.0
        %2384 = vmatprep.subr.mxu0 0.0
        %2385 = vmatpush2.msra.mxu0 0.0
        %2386 = vmatprep.subr.mxu0 0.0
        %2387 = vmatpush2.msra.mxu0 0.0
        %2388 = vmatprep.subr.mxu0 0.0
        %2389 = vmatpush2.msra.mxu0 0.0
        %2390 = vmatprep.subr.mxu0 0.0
        %2391 = vmatpush2.msra.mxu0 0.0
        %2392 = vmatprep.subr.mxu0 0.0
        %2393 = vmatpush2.msra.mxu0 0.0
        %2394 = vmatprep.subr.mxu0 0.0
        %2395 = vmatpush2.msra.mxu0 0.0
        %2396 = vmatprep.subr.mxu0 0.0
        %2397 = vmatpush2.msra.mxu0 0.0
        %2398 = vmatprep.subr.mxu0 0.0
        %2399 = vmatpush2.msra.mxu0 0.0
        %2400 = vmatprep.subr.mxu0 0.0
        %2401 = vmatpush2.msra.mxu0 0.0
        %2402 = vmatprep.mubr.f32.mxu0 0.0
        %2403 = vmatmul.mubr.f32.gmra.mxu0 %v2336
        %v2404 = vpop.f32.mrf.mxu0
        %v2405 = vadd.f32 0.0, %v2404
        %v2406 = vpop.f32.mrf.mxu0
        %v2407 = vadd.f32 0.0, %v2406
        %2408 = vdwg.mxu0
        %v2409 = vadd.f32 %v2304, %v2405
        %v2410 = vadd.f32 %v2305, %v2407
        %v2412 = vcombine.high %v1407, %v1407
        %v2416 = vrot.slane %v2409, 4
        %v2417 = vrot.slane %v2410, 4
        %v2420 = vsel %vm368, %v1407, %v2416
        %v2421 = vsel %vm368, %v2412, %v2417
        %s2422 = scalar_lea.vmem %s312, 16 [#allocation7]
        %2423 = vst [vmem:[%s2422] sm:$0xff] %v2420
        %2424 = vst [vmem:[%s2422 + $0x8] sm:$0xff] %v2421
        %s2425 = sand.u32 %s185, 1
        %s2426 = scalar_lea.sflag [#allocation4], %s2425
        %s2427 = sand.u32 %s185, 1
        %s2428 = smul.addr %s2427, 32
        %s2429 = scalar_lea.vmem [#allocation7], %s2428
        // Predicated region
        $region57: #{tpu_custom_call.1} parent=47 // pred_check
          %p2430 = pneg %p195
        $region58: #{tpu_custom_call.1} parent=47 // pred_check_branch
          %2432 = sbr.rel (%p2430) target = $region60
        $region59: #{tpu_custom_call.1} parent=47 // pred_region
          %s2433 = smul.u32 2, %s25
          %s2435 = ssub.s32 512, 512
          %2436 = vsyncadd %s2426, %s2435
          %s2437 = smul.addr %s2433, 2
          %s2438 = smul.addr %s2437, 128
          %s2439 = scalar_lea.hbm %s7, %s2438
          %s2440 = sshll.u32 %s2429, 4
          %s2441 = int_to_ptr.vmem [resolvable:$true] %s2440
          %2446 = dma.vmem_to_hbm [thread:$0]  %s2441, 512, %s2439, %s2426, 256, 256, 16
        $region60: #{tpu_custom_call.1} parent=47 // pred_fallthru
          _
      $region48: #{tpu_custom_call.1} parent=5 // pred_fallthru
        _
      %p2447 = scmp.le.s32.totalorder 2, %s20
      // Predicated region
      $region61: #{tpu_custom_call.1} parent=5 // pred_check
        %p2448 = pneg %p2447
      $region62: #{tpu_custom_call.1} parent=5 // pred_check_branch
        %2450 = sbr.rel (%p2448) target = $region64
      $region63: #{tpu_custom_call.1} parent=5 // pred_region
        %s2451 = ssub.s32 %s20, 2
        // Predicated region
        $region65: #{tpu_custom_call.1} parent=63 // pred_check
          %p2452 = pneg %p201
        $region66: #{tpu_custom_call.1} parent=63 // pred_check_branch
          %2454 = sbr.rel (%p2452) target = $region68
        $region67: #{tpu_custom_call.1} parent=63 // pred_region
          %s2455 = sand.u32 %s186, 1
          %s2456 = scalar_lea.sflag [#allocation4], %s2455
          %s2457 = sand.u32 %s186, 1
          %s2458 = smul.addr %s2457, 32
          %s2459 = scalar_lea.vmem [#allocation7], %s2458
          %2460 = dma.done %s2456, 512
        $region68: #{tpu_custom_call.1} parent=63 // pred_fallthru
          _
      $region64: #{tpu_custom_call.1} parent=5 // pred_fallthru
        _
    $region6: #{tpu_custom_call.1} parent=1 // loop_footer
      %s24 = sadd.s32 1, %s20
    $region7: #{tpu_custom_call.1} parent=1 // loop_footer_branch
      %19 = sbr.rel target = $region3
    $region8: #{tpu_custom_call.1} parent=1 // loop_exit
      _
    %2461 = vsyncpa [#allocation3], 1
    %s2462 = scalar_lea.sflag [#allocation3], 1
    %2463 = vsyncpa %s2462, 1
    %2464 = vsyncpa [#allocation6], 1
    %2465 = vsyncpa [#allocation4], 1
    %s2466 = scalar_lea.sflag [#allocation4], 1
    %2467 = vsyncpa %s2466, 1

</llo_original>
